<compile_context>
chip_gen: v6e
topology: v6e:2x2x1
jax: 0.10.0
libtpu: 0.0.40
codegen_flags: <defaults>
</compile_context>

<pallas_src>
import math
import jax
import jax.numpy as jnp
from jax import lax
from jax.experimental import pallas as pl
from jax.experimental.pallas import tpu as pltpu

# ----- model config (small, consistent with the module's constraints) -----
B = 2            # batch
T = 8            # sequence length
C = 96           # n_embd
N_HEAD = 6       # n_head
HEAD_DIM = C // N_HEAD                 # 16
HALF = HEAD_DIM // 2                   # 8
N_KV_HEAD = N_HEAD // 3                # 2
KV_GROUPS = N_HEAD // N_KV_HEAD        # 3
BT = B * T                             # 16
Q_DIM = N_HEAD * HEAD_DIM              # 96
KV_DIM = N_KV_HEAD * HEAD_DIM          # 32
QK_DIM = Q_DIM + KV_DIM                # 128  (q|k packed -> one aligned 128-lane block)
QKV_TOT = 2 * QK_DIM + KV_DIM          # 288  ([q|k] | [rot(q)|rot(k)] | v)
G = B * N_KV_HEAD                      # 4 attention groups (batch, kv_head)
GQ = KV_GROUPS * T                     # 24 query rows per group
INTER = 256      # intermediate_size
EPS = 1e-6
ROPE_BASE = 10000.0


# =======================  Pallas kernel  =======================
def decoder_layer_kernel(x_ref, ln_ref, wqkv_ref, wo_ref, rope_ref,
                         wgu_hbm, wd_hbm, out_ref,
                         wgu_vmem, wd_vmem, dma_sem):
    # --- start MLP-weight DMA immediately; it completes behind the attention half ---
    cp_gu = pltpu.make_async_copy(wgu_hbm, wgu_vmem, dma_sem.at[0])
    cp_d = pltpu.make_async_copy(wd_hbm, wd_vmem, dma_sem.at[1])
    cp_gu.start()
    cp_d.start()

    wdt = wqkv_ref.dtype                        # bf16 in production, f32 in exactness test

    x = x_ref[...]                              # [B, T, C]
    xf = x.reshape(BT, C)
    lns = ln_ref[...]                           # [2, C]
    ln1 = lns[0:1, :]
    ln2 = lns[1:2, :]

    # ---- input RMSNorm (single EUP rsqrt) ----
    ms = jnp.sum(xf * xf, axis=-1, keepdims=True) * (1.0 / C)
    xn = xf * lax.rsqrt(ms + EPS) * ln1         # [BT, C]

    # ---- ONE fused projection: [BT,C] @ [C,288] -> [q|k | rot(q)|rot(k) | v] (f32 accumulate) ----
    qkv = jnp.dot(xn.astype(wdt), wqkv_ref[...], preferred_element_type=jnp.float32)   # [BT, 288]

    # ---- RoPE: one element-wise FMA over the 128-lane-aligned [q|k] block ----
    rope = rope_ref[...]                        # [2, T, 128]  (cos/sin tiled across 6 q + 2 k heads)
    cos = rope[0:1, :, :]
    sin = rope[1:2, :, :]
    qk = qkv[:, :QK_DIM].reshape(B, T, QK_DIM)
    qk_rot = qkv[:, QK_DIM:2 * QK_DIM].reshape(B, T, QK_DIM)   # == rotate_half(x @ W), via weight folding
    roped = qk * cos + qk_rot * sin                            # [B, T, 128]
    v3 = qkv[:, 2 * QK_DIM:].reshape(B, T, KV_DIM)             # [B, T, 32]

    # ---- GQA group-batched layout: batch = (b, kv_head) = 4, rows = (q_head_in_group, t) = 24 ----
    qg = jnp.stack([roped[:, :, h * HEAD_DIM:(h + 1) * HEAD_DIM] for h in range(N_HEAD)], axis=1)
    qg = qg.reshape(G, GQ, HEAD_DIM)                                                   # [4,24,16]
    kg = jnp.stack([roped[:, :, Q_DIM + g * HEAD_DIM:Q_DIM + (g + 1) * HEAD_DIM]
                    for g in range(N_KV_HEAD)], axis=1)
    kg = kg.reshape(G, T, HEAD_DIM)                                                    # [4,8,16]  (no 3x dup)
    vg = jnp.stack([v3[:, :, g * HEAD_DIM:(g + 1) * HEAD_DIM] for g in range(N_KV_HEAD)], axis=1)
    vg = vg.reshape(G, T, HEAD_DIM)                                                    # [4,8,16]

    # ---- scaled-dot-product attention (causal): 4 batched matmuls per einsum ----
    scale = 1.0 / math.sqrt(HEAD_DIM)
    s = jnp.einsum('gqd,gkd->gqk', qg, kg, preferred_element_type=jnp.float32) * scale  # [4,24,8]
    causal = (lax.broadcasted_iota(jnp.int32, (T, T), 0)
              >= lax.broadcasted_iota(jnp.int32, (T, T), 1))
    s4 = jnp.where(causal[None, None], s.reshape(G, KV_GROUPS, T, T), -1e30)
    s = s4.reshape(G, GQ, T)
    s = s - jnp.max(s, axis=-1, keepdims=True)
    p = jnp.exp(s)
    p = p * pl.reciprocal(jnp.sum(p, axis=-1, keepdims=True), approx=False)  # exact; approx=True also OK
    o = jnp.einsum('gqk,gkd->gqd', p, vg, preferred_element_type=jnp.float32)           # [4,24,16]

    # ---- back to token-major, then ONE o_proj matmul (head reduction in the MXU accumulator) ----
    o5 = o.reshape(B, N_KV_HEAD, KV_GROUPS, T, HEAD_DIM)
    attn_in = jnp.concatenate(
        [o5[:, h // KV_GROUPS, h % KV_GROUPS] for h in range(N_HEAD)], axis=-1)         # [B,T,96]
    attn = jnp.dot(attn_in.reshape(BT, C).astype(wdt), wo_ref[...],
                   preferred_element_type=jnp.float32)                                  # [BT, C]

    h1 = xf + attn                              # residual 1

    # ---- post-attention RMSNorm ----
    ms2 = jnp.sum(h1 * h1, axis=-1, keepdims=True) * (1.0 / C)
    hn = h1 * lax.rsqrt(ms2 + EPS) * ln2

    # ---- MLP weights have been DMAing behind everything above; sync now ----
    cp_gu.wait()
    cp_d.wait()

    # ---- SwiGLU MLP with fused gate/up weight ----
    gu = jnp.dot(hn.astype(wdt), wgu_vmem[...], preferred_element_type=jnp.float32)     # [BT, 2*INTER]
    gate = gu[:, :INTER]
    up = gu[:, INTER:]
    act = gate * jax.nn.sigmoid(gate) * up
    mlp = jnp.dot(act.astype(wdt), wd_vmem[...], preferred_element_type=jnp.float32)    # [BT, C]

    out_ref[...] = (h1 + mlp).reshape(B, T, C)  # residual 2


# =======================  host-side helpers (run ONCE per layer)  =======================
def _rope_head_tables():
    """cos/sin tables for ONE head: [T, HEAD_DIM] (same as LlamaRotaryEmbedding)."""
    inv_freq = 1.0 / (ROPE_BASE ** (jnp.arange(0, HEAD_DIM, 2, dtype=jnp.float32) / HEAD_DIM))
    t = jnp.arange(T, dtype=jnp.float32)
    freqs = jnp.einsum('i,j->ij', t, inv_freq)               # [T, hd/2]
    emb = jnp.concatenate([freqs, freqs], axis=-1)           # [T, hd]
    return jnp.cos(emb), jnp.sin(emb)


def _fold_rotate_half_into_weight(w):
    """Return w' with  x @ w' == rotate_half(x @ w)  (exact signed column permutation).
    w: [C, n_head_blocks*HEAD_DIM], columns head-major."""
    w3 = w.reshape(C, -1, HEAD_DIM)
    w_rot = jnp.concatenate([-w3[..., HALF:], w3[..., :HALF]], axis=-1)
    return w_rot.reshape(C, -1)


def prepare_kernel_inputs(p, weight_dtype=jnp.bfloat16):
    """One-time weight fusion (call at init, cache the result; NOT on the per-forward path)."""
    ln = jnp.stack([p['ln1'], p['ln2']], axis=0).astype(jnp.float32)           # [2, C]
    wqk = jnp.concatenate([p['wq'], p['wk']], axis=1)                          # [C, 128]
    wqkv = jnp.concatenate([wqk, _fold_rotate_half_into_weight(wqk), p['wv']], axis=1)   # [C, 288]
    wgu = jnp.concatenate([p['wg'], p['wu']], axis=1)                          # [C, 2*INTER]
    cos_h, sin_h = _rope_head_tables()
    n_slots = QK_DIM // HEAD_DIM                                               # 8 = 6 q heads + 2 k heads
    rope = jnp.stack([jnp.tile(cos_h, (1, n_slots)),
                      jnp.tile(sin_h, (1, n_slots))], axis=0).astype(jnp.float32)        # [2, T, 128]
    cast = lambda a: a.astype(weight_dtype)
    return (ln, cast(wqkv), cast(p['wo']), rope, cast(wgu), cast(p['wd']))


def llama_decoder_layer(x, fused):
    """x: [B,T,C] f32; fused: cached output of prepare_kernel_inputs()."""
    ln, wqkv, wo, rope, wgu, wd = fused
    wdt = wqkv.dtype

    flops = (2 * BT * C * QKV_TOT                     # fused QKV
             + 2 * G * GQ * T * HEAD_DIM * 2          # scores + PV
             + 2 * BT * C * C                         # o_proj
             + 2 * BT * C * (2 * INTER)               # gate/up
             + 2 * BT * INTER * C)                    # down
    transcendentals = G * GQ * T + BT * INTER + 4 * BT
    bytes_accessed = (sum(int(a.size) * a.dtype.itemsize for a in (x,) + fused)
                      + int(x.size) * 4)

    vmem = pl.BlockSpec(memory_space=pltpu.MemorySpace.VMEM)
    hbm = pl.BlockSpec(memory_space=pl.ANY)           # MLP weights: DMA'd manually inside the kernel

    return pl.pallas_call(
        decoder_layer_kernel,
        out_shape=jax.ShapeDtypeStruct(x.shape, jnp.float32),
        in_specs=[vmem, vmem, vmem, vmem, vmem, hbm, hbm],
        out_specs=vmem,
        scratch_shapes=[
            pltpu.VMEM((C, 2 * INTER), wdt),          # wgu landing buffer
            pltpu.VMEM((INTER, C), wdt),              # wd landing buffer
            pltpu.SemaphoreType.DMA((2,)),
        ],
        cost_estimate=pl.CostEstimate(flops=int(flops),
                                      transcendentals=int(transcendentals),
                                      bytes_accessed=int(bytes_accessed)),
    )(x, ln, wqkv, wo, rope, wgu, wd)


# ---------------- parameter construction (deterministic) ----------------
def make_params(key):
    ks = jax.random.split(key, 7)
    scale = 0.02

    def lin(k, fan_in, fan_out):
        # stored as [in, out] so the kernel computes x @ W (PyTorch Linear keeps [out, in])
        return (scale * jax.random.normal(k, (fan_in, fan_out))).astype(jnp.float32)

    return {
        'ln1': jnp.ones((C,), jnp.float32),
        'ln2': jnp.ones((C,), jnp.float32),
        'wq': lin(ks[0], C, Q_DIM),
        'wk': lin(ks[1], C, KV_DIM),
        'wv': lin(ks[2], C, KV_DIM),
        'wo': lin(ks[3], C, C),
        'wg': lin(ks[4], C, INTER),
        'wu': lin(ks[5], C, INTER),
        'wd': lin(ks[6], INTER, C),
    }


# ---------------- plain-JAX reference (mirrors the PyTorch forward) ----------------
def _rotate_half(x):
    half = x.shape[-1] // 2
    return jnp.concatenate([-x[..., half:], x[..., :half]], axis=-1)


def reference_forward(x, p):
    def rmsnorm(x, w):
        rms = jnp.sqrt(jnp.mean(x * x, axis=-1, keepdims=True) + EPS)
        return w.reshape(1, 1, C) * (x / rms)

    cos_h, sin_h = _rope_head_tables()                      # [T, hd]
    residual = x
    xn = rmsnorm(x, p['ln1'])
    q = (xn @ p['wq']).reshape(B, T, N_HEAD, HEAD_DIM)
    k = (xn @ p['wk']).reshape(B, T, N_KV_HEAD, HEAD_DIM)
    v = (xn @ p['wv']).reshape(B, T, N_KV_HEAD, HEAD_DIM)
    k = jnp.repeat(k, KV_GROUPS, axis=2)
    v = jnp.repeat(v, KV_GROUPS, axis=2)
    q = q.transpose(0, 2, 1, 3)     # [B,H,T,hd]
    k = k.transpose(0, 2, 1, 3)
    v = v.transpose(0, 2, 1, 3)
    cos = cos_h[None, None]         # [1,1,T,hd]
    sin = sin_h[None, None]
    q = q * cos + _rotate_half(q) * sin
    k = k * cos + _rotate_half(k) * sin
    s = jnp.einsum('bhqd,bhkd->bhqk', q, k) / math.sqrt(HEAD_DIM)
    mask = jnp.tril(jnp.ones((T, T), bool))
    s = jnp.where(mask[None, None], s, -jnp.inf)
    pattn = jax.nn.softmax(s, axis=-1)
    out = jnp.einsum('bhqk,bhkd->bhqd', pattn, v)
    out = out.transpose(0, 2, 1, 3).reshape(B, T, C) @ p['wo']
    x = residual + out
    residual = x
    xn = rmsnorm(x, p['ln2'])
    mlp = (jax.nn.silu(xn @ p['wg']) * (xn @ p['wu'])) @ p['wd']
    return residual + mlp


if __name__ == "__main__":
    key = jax.random.PRNGKey(0)
    kx, kp = jax.random.split(key)
    x = jax.random.normal(kx, (B, T, C), dtype=jnp.float32)
    params = make_params(kp)
    ref = jax.block_until_ready(reference_forward(x, params))

    # ---- exactness check: f32 weights must match the reference at 1e-4 ----
    fused_f32 = prepare_kernel_inputs(params, jnp.float32)          # one-time weight fusion
    out_f32 = jax.block_until_ready(llama_decoder_layer(x, fused_f32))
    assert out_f32.shape == (B, T, C)
    err_f32 = jnp.max(jnp.abs(out_f32 - ref))
    assert jnp.allclose(out_f32, ref, rtol=1e-4, atol=1e-4), f"f32 max abs err {err_f32}"

    # ---- production path: bf16 weights, f32 accumulation (tolerance covers bf16 quantization) ----
    fused_bf16 = prepare_kernel_inputs(params, jnp.bfloat16)        # cached once at init in practice
    out_bf16 = jax.block_until_ready(llama_decoder_layer(x, fused_bf16))
    err_bf16 = jnp.max(jnp.abs(out_bf16 - ref))
    assert jnp.allclose(out_bf16, ref, rtol=2e-2, atol=2e-2), f"bf16 max abs err {err_bf16}"

    print("KERNEL_OK")
</pallas_src>

<mosaic_0001>
module attributes {stable_mosaic.version = 11 : i64} {
  func.func @decoder_layer_kernel(%arg0: memref<2x8x96xf32, #tpu.memory_space<vmem>>, %arg1: memref<2x96xf32, #tpu.memory_space<vmem>>, %arg2: memref<96x288xf32, #tpu.memory_space<vmem>>, %arg3: memref<96x96xf32, #tpu.memory_space<vmem>>, %arg4: memref<2x8x128xf32, #tpu.memory_space<vmem>>, %arg5: memref<96x512xf32, #tpu.memory_space<any>>, %arg6: memref<256x96xf32, #tpu.memory_space<any>>, %arg7: memref<2x8x96xf32, #tpu.memory_space<vmem>>, %arg8: memref<96x512xf32, #tpu.memory_space<vmem>>, %arg9: memref<256x96xf32, #tpu.memory_space<vmem>>, %arg10: memref<2x!tpu.dma_semaphore, #tpu.memory_space<semaphore_mem>>) attributes {dimension_semantics = [], scalar_prefetch = 0 : i64, scratch_operands = 3 : i64, tpu.core_type = #tpu.core_type<tc>} {
    %c0_i32 = arith.constant 0 : i32
    %0 = tpu.memref_slice %arg10[%c0_i32] : memref<2x!tpu.dma_semaphore, #tpu.memory_space<semaphore_mem>> -> memref<1x!tpu.dma_semaphore, #tpu.memory_space<semaphore_mem>>
    %1 = tpu.memref_squeeze %0 : memref<1x!tpu.dma_semaphore, #tpu.memory_space<semaphore_mem>> -> memref<!tpu.dma_semaphore, #tpu.memory_space<semaphore_mem>>
    tpu.enqueue_dma source(%arg5 : memref<96x512xf32, #tpu.memory_space<any>>) target(%arg8 : memref<96x512xf32, #tpu.memory_space<vmem>>) target_semaphore(%1 : memref<!tpu.dma_semaphore, #tpu.memory_space<semaphore_mem>>)
    %c1_i32 = arith.constant 1 : i32
    %2 = tpu.memref_slice %arg10[%c1_i32] : memref<2x!tpu.dma_semaphore, #tpu.memory_space<semaphore_mem>> -> memref<1x!tpu.dma_semaphore, #tpu.memory_space<semaphore_mem>>
    %3 = tpu.memref_squeeze %2 : memref<1x!tpu.dma_semaphore, #tpu.memory_space<semaphore_mem>> -> memref<!tpu.dma_semaphore, #tpu.memory_space<semaphore_mem>>
    tpu.enqueue_dma source(%arg6 : memref<256x96xf32, #tpu.memory_space<any>>) target(%arg9 : memref<256x96xf32, #tpu.memory_space<vmem>>) target_semaphore(%3 : memref<!tpu.dma_semaphore, #tpu.memory_space<semaphore_mem>>)
    %c0 = arith.constant 0 : index
    %c0_0 = arith.constant 0 : index
    %c0_1 = arith.constant 0 : index
    %4 = vector.load %arg0[%c0, %c0_0, %c0_1] : memref<2x8x96xf32, #tpu.memory_space<vmem>>, vector<2x8x96xf32>
    %5 = vector.shape_cast %4 : vector<2x8x96xf32> to vector<16x96xf32>
    %c0_2 = arith.constant 0 : index
    %c0_3 = arith.constant 0 : index
    %6 = vector.load %arg1[%c0_2, %c0_3] : memref<2x96xf32, #tpu.memory_space<vmem>>, vector<2x96xf32>
    %7 = vector.extract_strided_slice %6 {offsets = [0, 0], sizes = [1, 96], strides = [1, 1]} : vector<2x96xf32> to vector<1x96xf32>
    %8 = vector.extract_strided_slice %6 {offsets = [1, 0], sizes = [1, 96], strides = [1, 1]} : vector<2x96xf32> to vector<1x96xf32>
    %9 = arith.mulf %5, %5 : vector<16x96xf32>
    %cst = arith.constant dense<0.000000e+00> : vector<16xf32>
    %10 = vector.multi_reduction <add>, %9, %cst [1] : vector<16x96xf32> to vector<16xf32>
    %11 = vector.shape_cast %10 : vector<16xf32> to vector<16x1xf32>
    %cst_4 = arith.constant 0.010416667 : f32
    %12 = vector.broadcast %cst_4 : f32 to vector<16x1xf32>
    %13 = arith.mulf %11, %12 : vector<16x1xf32>
    %cst_5 = arith.constant 9.99999997E-7 : f32
    %14 = vector.broadcast %cst_5 : f32 to vector<16x1xf32>
    %15 = arith.addf %13, %14 : vector<16x1xf32>
    %16 = math.rsqrt %15 : vector<16x1xf32>
    %17 = vector.broadcast %16 : vector<16x1xf32> to vector<16x96xf32>
    %18 = arith.mulf %5, %17 : vector<16x96xf32>
    %19 = vector.broadcast %7 : vector<1x96xf32> to vector<16x96xf32>
    %20 = arith.mulf %18, %19 : vector<16x96xf32>
    %c0_6 = arith.constant 0 : index
    %c0_7 = arith.constant 0 : index
    %21 = vector.load %arg2[%c0_6, %c0_7] : memref<96x288xf32, #tpu.memory_space<vmem>>, vector<96x288xf32>
    %cst_8 = arith.constant dense<0.000000e+00> : vector<16x288xf32>
    %22 = tpu.matmul %20, %21, %cst_8 {dimension_numbers = #tpu.dot_dimension_numbers<[1], [0], [0], [1], [0, 0, 1, 1], [], []>} : vector<16x96xf32>, vector<96x288xf32>, vector<16x288xf32> -> vector<16x288xf32>
    %c0_9 = arith.constant 0 : index
    %c0_10 = arith.constant 0 : index
    %c0_11 = arith.constant 0 : index
    %23 = vector.load %arg4[%c0_9, %c0_10, %c0_11] : memref<2x8x128xf32, #tpu.memory_space<vmem>>, vector<2x8x128xf32>
    %24 = vector.extract_strided_slice %23 {offsets = [0, 0, 0], sizes = [1, 8, 128], strides = [1, 1, 1]} : vector<2x8x128xf32> to vector<1x8x128xf32>
    %25 = vector.extract_strided_slice %23 {offsets = [1, 0, 0], sizes = [1, 8, 128], strides = [1, 1, 1]} : vector<2x8x128xf32> to vector<1x8x128xf32>
    %26 = vector.extract_strided_slice %22 {offsets = [0, 0], sizes = [16, 128], strides = [1, 1]} : vector<16x288xf32> to vector<16x128xf32>
    %27 = vector.shape_cast %26 : vector<16x128xf32> to vector<2x8x128xf32>
    %28 = vector.extract_strided_slice %22 {offsets = [0, 128], sizes = [16, 128], strides = [1, 1]} : vector<16x288xf32> to vector<16x128xf32>
    %29 = vector.shape_cast %28 : vector<16x128xf32> to vector<2x8x128xf32>
    %30 = vector.broadcast %24 : vector<1x8x128xf32> to vector<2x8x128xf32>
    %31 = arith.mulf %27, %30 : vector<2x8x128xf32>
    %32 = vector.broadcast %25 : vector<1x8x128xf32> to vector<2x8x128xf32>
    %33 = arith.mulf %29, %32 : vector<2x8x128xf32>
    %34 = arith.addf %31, %33 : vector<2x8x128xf32>
    %35 = vector.extract_strided_slice %22 {offsets = [0, 256], sizes = [16, 32], strides = [1, 1]} : vector<16x288xf32> to vector<16x32xf32>
    %36 = vector.shape_cast %35 : vector<16x32xf32> to vector<2x8x32xf32>
    %37 = vector.extract_strided_slice %34 {offsets = [0, 0, 0], sizes = [2, 8, 16], strides = [1, 1, 1]} : vector<2x8x128xf32> to vector<2x8x16xf32>
    %38 = vector.extract_strided_slice %34 {offsets = [0, 0, 16], sizes = [2, 8, 16], strides = [1, 1, 1]} : vector<2x8x128xf32> to vector<2x8x16xf32>
    %39 = vector.extract_strided_slice %34 {offsets = [0, 0, 32], sizes = [2, 8, 16], strides = [1, 1, 1]} : vector<2x8x128xf32> to vector<2x8x16xf32>
    %40 = vector.extract_strided_slice %34 {offsets = [0, 0, 48], sizes = [2, 8, 16], strides = [1, 1, 1]} : vector<2x8x128xf32> to vector<2x8x16xf32>
    %41 = vector.extract_strided_slice %34 {offsets = [0, 0, 64], sizes = [2, 8, 16], strides = [1, 1, 1]} : vector<2x8x128xf32> to vector<2x8x16xf32>
    %42 = vector.extract_strided_slice %34 {offsets = [0, 0, 80], sizes = [2, 8, 16], strides = [1, 1, 1]} : vector<2x8x128xf32> to vector<2x8x16xf32>
    %43 = vector.shape_cast %37 : vector<2x8x16xf32> to vector<2x1x8x16xf32>
    %44 = vector.shape_cast %38 : vector<2x8x16xf32> to vector<2x1x8x16xf32>
    %45 = vector.shape_cast %39 : vector<2x8x16xf32> to vector<2x1x8x16xf32>
    %46 = vector.shape_cast %40 : vector<2x8x16xf32> to vector<2x1x8x16xf32>
    %47 = vector.shape_cast %41 : vector<2x8x16xf32> to vector<2x1x8x16xf32>
    %48 = vector.shape_cast %42 : vector<2x8x16xf32> to vector<2x1x8x16xf32>
    %49 = tpu.concatenate %43, %44, %45, %46, %47, %48 in 1 : vector<2x1x8x16xf32>, vector<2x1x8x16xf32>, vector<2x1x8x16xf32>, vector<2x1x8x16xf32>, vector<2x1x8x16xf32>, vector<2x1x8x16xf32> -> vector<2x6x8x16xf32>
    %50 = vector.shape_cast %49 : vector<2x6x8x16xf32> to vector<4x24x16xf32>
    %51 = vector.extract_strided_slice %34 {offsets = [0, 0, 96], sizes = [2, 8, 16], strides = [1, 1, 1]} : vector<2x8x128xf32> to vector<2x8x16xf32>
    %52 = vector.extract_strided_slice %34 {offsets = [0, 0, 112], sizes = [2, 8, 16], strides = [1, 1, 1]} : vector<2x8x128xf32> to vector<2x8x16xf32>
    %53 = vector.shape_cast %51 : vector<2x8x16xf32> to vector<2x1x8x16xf32>
    %54 = vector.shape_cast %52 : vector<2x8x16xf32> to vector<2x1x8x16xf32>
    %55 = tpu.concatenate %53, %54 in 1 : vector<2x1x8x16xf32>, vector<2x1x8x16xf32> -> vector<2x2x8x16xf32>
    %56 = vector.shape_cast %55 : vector<2x2x8x16xf32> to vector<4x8x16xf32>
    %57 = vector.extract_strided_slice %36 {offsets = [0, 0, 0], sizes = [2, 8, 16], strides = [1, 1, 1]} : vector<2x8x32xf32> to vector<2x8x16xf32>
    %58 = vector.extract_strided_slice %36 {offsets = [0, 0, 16], sizes = [2, 8, 16], strides = [1, 1, 1]} : vector<2x8x32xf32> to vector<2x8x16xf32>
    %59 = vector.shape_cast %57 : vector<2x8x16xf32> to vector<2x1x8x16xf32>
    %60 = vector.shape_cast %58 : vector<2x8x16xf32> to vector<2x1x8x16xf32>
    %61 = tpu.concatenate %59, %60 in 1 : vector<2x1x8x16xf32>, vector<2x1x8x16xf32> -> vector<2x2x8x16xf32>
    %62 = vector.shape_cast %61 : vector<2x2x8x16xf32> to vector<4x8x16xf32>
    "tpu.trace_start"() <{level = 10 : i32, message = "gqd,gkd->gqk"}> : () -> ()
    %cst_12 = arith.constant dense<0.000000e+00> : vector<4x24x8xf32>
    %63 = tpu.matmul %50, %56, %cst_12 {dimension_numbers = #tpu.dot_dimension_numbers<[2], [2], [1], [1], [0, 0, 0, 1, 1, 1], [0], [0]>} : vector<4x24x16xf32>, vector<4x8x16xf32>, vector<4x24x8xf32> -> vector<4x24x8xf32>
    "tpu.trace_stop"() : () -> ()
    %cst_13 = arith.constant 2.500000e-01 : f32
    %64 = vector.broadcast %cst_13 : f32 to vector<4x24x8xf32>
    %65 = arith.mulf %63, %64 : vector<4x24x8xf32>
    %66 = tpu.iota {dimensions = array<i32: 0>} : vector<8x8xi32>
    %67 = tpu.iota {dimensions = array<i32: 1>} : vector<8x8xi32>
    %68 = arith.cmpi sge, %66, %67 : vector<8x8xi32>
    %69 = vector.shape_cast %68 : vector<8x8xi1> to vector<1x1x8x8xi1>
    %70 = vector.shape_cast %65 : vector<4x24x8xf32> to vector<4x3x8x8xf32>
    %cst_14 = arith.constant -1.000000e+30 : f32
    %71 = vector.shape_cast %69 : vector<1x1x8x8xi1> to vector<1x1x8x8xi1>
    %72 = vector.broadcast %71 : vector<1x1x8x8xi1> to vector<4x3x8x8xi1>
    %73 = vector.broadcast %cst_14 : f32 to vector<4x3x8x8xf32>
    %74 = arith.select %72, %70, %73 : vector<4x3x8x8xi1>, vector<4x3x8x8xf32>
    %75 = vector.shape_cast %74 : vector<4x3x8x8xf32> to vector<4x24x8xf32>
    %cst_15 = arith.constant dense<0xFF800000> : vector<4x24xf32>
    %76 = vector.multi_reduction <maximumf>, %75, %cst_15 [2] : vector<4x24x8xf32> to vector<4x24xf32>
    %77 = vector.shape_cast %76 : vector<4x24xf32> to vector<4x24x1xf32>
    %78 = vector.broadcast %77 : vector<4x24x1xf32> to vector<4x24x8xf32>
    %79 = arith.subf %75, %78 : vector<4x24x8xf32>
    %80 = math.exp %79 : vector<4x24x8xf32>
    %cst_16 = arith.constant dense<0.000000e+00> : vector<4x24xf32>
    %81 = vector.multi_reduction <add>, %80, %cst_16 [2] : vector<4x24x8xf32> to vector<4x24xf32>
    %82 = vector.shape_cast %81 : vector<4x24xf32> to vector<4x24x1xf32>
    %83 = tpu.reciprocal %82 : vector<4x24x1xf32> -> vector<4x24x1xf32>
    %84 = vector.broadcast %83 : vector<4x24x1xf32> to vector<4x24x8xf32>
    %85 = arith.mulf %80, %84 : vector<4x24x8xf32>
    "tpu.trace_start"() <{level = 10 : i32, message = "gqk,gkd->gqd"}> : () -> ()
    %cst_17 = arith.constant dense<0.000000e+00> : vector<4x24x16xf32>
    %86 = tpu.matmul %85, %62, %cst_17 {dimension_numbers = #tpu.dot_dimension_numbers<[2], [1], [1], [2], [0, 0, 0, 1, 1, 2], [0], [0]>} : vector<4x24x8xf32>, vector<4x8x16xf32>, vector<4x24x16xf32> -> vector<4x24x16xf32>
    "tpu.trace_stop"() : () -> ()
    %87 = vector.shape_cast %86 : vector<4x24x16xf32> to vector<2x2x3x8x16xf32>
    %88 = vector.extract_strided_slice %87 {offsets = [0, 0, 0, 0, 0], sizes = [2, 1, 1, 8, 16], strides = [1, 1, 1, 1, 1]} : vector<2x2x3x8x16xf32> to vector<2x1x1x8x16xf32>
    %89 = vector.shape_cast %88 : vector<2x1x1x8x16xf32> to vector<2x8x16xf32>
    %90 = vector.extract_strided_slice %87 {offsets = [0, 0, 1, 0, 0], sizes = [2, 1, 1, 8, 16], strides = [1, 1, 1, 1, 1]} : vector<2x2x3x8x16xf32> to vector<2x1x1x8x16xf32>
    %91 = vector.shape_cast %90 : vector<2x1x1x8x16xf32> to vector<2x8x16xf32>
    %92 = vector.extract_strided_slice %87 {offsets = [0, 0, 2, 0, 0], sizes = [2, 1, 1, 8, 16], strides = [1, 1, 1, 1, 1]} : vector<2x2x3x8x16xf32> to vector<2x1x1x8x16xf32>
    %93 = vector.shape_cast %92 : vector<2x1x1x8x16xf32> to vector<2x8x16xf32>
    %94 = vector.extract_strided_slice %87 {offsets = [0, 1, 0, 0, 0], sizes = [2, 1, 1, 8, 16], strides = [1, 1, 1, 1, 1]} : vector<2x2x3x8x16xf32> to vector<2x1x1x8x16xf32>
    %95 = vector.shape_cast %94 : vector<2x1x1x8x16xf32> to vector<2x8x16xf32>
    %96 = vector.extract_strided_slice %87 {offsets = [0, 1, 1, 0, 0], sizes = [2, 1, 1, 8, 16], strides = [1, 1, 1, 1, 1]} : vector<2x2x3x8x16xf32> to vector<2x1x1x8x16xf32>
    %97 = vector.shape_cast %96 : vector<2x1x1x8x16xf32> to vector<2x8x16xf32>
    %98 = vector.extract_strided_slice %87 {offsets = [0, 1, 2, 0, 0], sizes = [2, 1, 1, 8, 16], strides = [1, 1, 1, 1, 1]} : vector<2x2x3x8x16xf32> to vector<2x1x1x8x16xf32>
    %99 = vector.shape_cast %98 : vector<2x1x1x8x16xf32> to vector<2x8x16xf32>
    %100 = tpu.concatenate %89, %91, %93, %95, %97, %99 in 2 : vector<2x8x16xf32>, vector<2x8x16xf32>, vector<2x8x16xf32>, vector<2x8x16xf32>, vector<2x8x16xf32>, vector<2x8x16xf32> -> vector<2x8x96xf32>
    %101 = vector.shape_cast %100 : vector<2x8x96xf32> to vector<16x96xf32>
    %c0_18 = arith.constant 0 : index
    %c0_19 = arith.constant 0 : index
    %102 = vector.load %arg3[%c0_18, %c0_19] : memref<96x96xf32, #tpu.memory_space<vmem>>, vector<96x96xf32>
    %cst_20 = arith.constant dense<0.000000e+00> : vector<16x96xf32>
    %103 = tpu.matmul %101, %102, %cst_20 {dimension_numbers = #tpu.dot_dimension_numbers<[1], [0], [0], [1], [0, 0, 1, 1], [], []>} : vector<16x96xf32>, vector<96x96xf32>, vector<16x96xf32> -> vector<16x96xf32>
    %104 = arith.addf %5, %103 : vector<16x96xf32>
    %105 = arith.mulf %104, %104 : vector<16x96xf32>
    %cst_21 = arith.constant dense<0.000000e+00> : vector<16xf32>
    %106 = vector.multi_reduction <add>, %105, %cst_21 [1] : vector<16x96xf32> to vector<16xf32>
    %107 = vector.shape_cast %106 : vector<16xf32> to vector<16x1xf32>
    %cst_22 = arith.constant 0.010416667 : f32
    %108 = vector.broadcast %cst_22 : f32 to vector<16x1xf32>
    %109 = arith.mulf %107, %108 : vector<16x1xf32>
    %cst_23 = arith.constant 9.99999997E-7 : f32
    %110 = vector.broadcast %cst_23 : f32 to vector<16x1xf32>
    %111 = arith.addf %109, %110 : vector<16x1xf32>
    %112 = math.rsqrt %111 : vector<16x1xf32>
    %113 = vector.broadcast %112 : vector<16x1xf32> to vector<16x96xf32>
    %114 = arith.mulf %104, %113 : vector<16x96xf32>
    %115 = vector.broadcast %8 : vector<1x96xf32> to vector<16x96xf32>
    %116 = arith.mulf %114, %115 : vector<16x96xf32>
    %c0_i32_24 = arith.constant 0 : i32
    %117 = tpu.memref_slice %arg10[%c0_i32_24] : memref<2x!tpu.dma_semaphore, #tpu.memory_space<semaphore_mem>> -> memref<1x!tpu.dma_semaphore, #tpu.memory_space<semaphore_mem>>
    %118 = tpu.memref_squeeze %117 : memref<1x!tpu.dma_semaphore, #tpu.memory_space<semaphore_mem>> -> memref<!tpu.dma_semaphore, #tpu.memory_space<semaphore_mem>>
    tpu.wait_dma2 semaphore(%118 : memref<!tpu.dma_semaphore, #tpu.memory_space<semaphore_mem>>) src(%arg5 : memref<96x512xf32, #tpu.memory_space<any>>) dst(%arg8 : memref<96x512xf32, #tpu.memory_space<vmem>>)
    %c1_i32_25 = arith.constant 1 : i32
    %119 = tpu.memref_slice %arg10[%c1_i32_25] : memref<2x!tpu.dma_semaphore, #tpu.memory_space<semaphore_mem>> -> memref<1x!tpu.dma_semaphore, #tpu.memory_space<semaphore_mem>>
    %120 = tpu.memref_squeeze %119 : memref<1x!tpu.dma_semaphore, #tpu.memory_space<semaphore_mem>> -> memref<!tpu.dma_semaphore, #tpu.memory_space<semaphore_mem>>
    tpu.wait_dma2 semaphore(%120 : memref<!tpu.dma_semaphore, #tpu.memory_space<semaphore_mem>>) src(%arg6 : memref<256x96xf32, #tpu.memory_space<any>>) dst(%arg9 : memref<256x96xf32, #tpu.memory_space<vmem>>)
    %c0_26 = arith.constant 0 : index
    %c0_27 = arith.constant 0 : index
    %121 = vector.load %arg8[%c0_26, %c0_27] : memref<96x512xf32, #tpu.memory_space<vmem>>, vector<96x512xf32>
    %cst_28 = arith.constant dense<0.000000e+00> : vector<16x512xf32>
    %122 = tpu.matmul %116, %121, %cst_28 {dimension_numbers = #tpu.dot_dimension_numbers<[1], [0], [0], [1], [0, 0, 1, 1], [], []>} : vector<16x96xf32>, vector<96x512xf32>, vector<16x512xf32> -> vector<16x512xf32>
    %123 = vector.extract_strided_slice %122 {offsets = [0, 0], sizes = [16, 256], strides = [1, 1]} : vector<16x512xf32> to vector<16x256xf32>
    %124 = vector.extract_strided_slice %122 {offsets = [0, 256], sizes = [16, 256], strides = [1, 1]} : vector<16x512xf32> to vector<16x256xf32>
    %125 = arith.negf %123 : vector<16x256xf32>
    %126 = math.exp %125 : vector<16x256xf32>
    %cst_29 = arith.constant 1.000000e+00 : f32
    %127 = vector.broadcast %cst_29 : f32 to vector<16x256xf32>
    %128 = arith.addf %127, %126 : vector<16x256xf32>
    %129 = arith.divf %127, %128 : vector<16x256xf32>
    %130 = arith.mulf %123, %129 : vector<16x256xf32>
    %131 = arith.mulf %130, %124 : vector<16x256xf32>
    %c0_30 = arith.constant 0 : index
    %c0_31 = arith.constant 0 : index
    %132 = vector.load %arg9[%c0_30, %c0_31] : memref<256x96xf32, #tpu.memory_space<vmem>>, vector<256x96xf32>
    %cst_32 = arith.constant dense<0.000000e+00> : vector<16x96xf32>
    %133 = tpu.matmul %131, %132, %cst_32 {dimension_numbers = #tpu.dot_dimension_numbers<[1], [0], [0], [1], [0, 0, 1, 1], [], []>} : vector<16x256xf32>, vector<256x96xf32>, vector<16x96xf32> -> vector<16x96xf32>
    %134 = arith.addf %104, %133 : vector<16x96xf32>
    %135 = vector.shape_cast %134 : vector<16x96xf32> to vector<2x8x96xf32>
    %c0_33 = arith.constant 0 : index
    %c0_34 = arith.constant 0 : index
    %c0_35 = arith.constant 0 : index
    %136 = vector.load %arg7[%c0_33, %c0_34, %c0_35] : memref<2x8x96xf32, #tpu.memory_space<vmem>>, vector<2x8x96xf32>
    tpu.vector_store %arg7[%c0_33, %c0_34, %c0_35], %135 {strides = array<i32>} : memref<2x8x96xf32, #tpu.memory_space<vmem>>, vector<2x8x96xf32>,
    return
  }
}

</mosaic_0001>

<llo_original>
// kernel: tpu_custom_call.1
$region0: #{tpu_custom_call.1}
  #allocation0 [shape = 'u32[]', space=smem, size = 0x4, offset = 0x4, fixed_abs, tag = 'smem constant byte address 0x4 - core index']
  #allocation1 [shape = 'u32[144,128]{1,0:T(1,128)}', space=vmem, size = 0x12000, scoped, tag = 'internal scratch']
  #allocation2 [shape = 'f32[96,512]{1,0:T(8,128)}', space=vmem, size = 0x30000, scoped, tag = 'scratch operand']
  #allocation3 [shape = 'f32[256,96]{1,0:T(8,128)}', space=vmem, size = 0x20000, scoped, tag = 'scratch operand']
  #allocation4 [shape = 's32[2]{0}', space=sflag, size = 0x8, scoped, tag = 'scratch operand']
  #allocation11 [shape = 's32[]', space=sflag, size = 0x4, offset = 0, fixed_abs, tag = 'sflag constant byte address 0x0 - dummy sync flag']
  #allocation12 [shape = 's32[]', space=sflag, size = 0x4, offset = 0, fixed_abs, tag = 'sflag constant byte address 0x0 - dummy sync flag']
  %s0 = inlined_call_operand.vmem [shape: f32[2,8,96], index: 0, kind: input, shape index: {}]
  %s1 = inlined_call_operand.vmem [shape: f32[2,96], index: 1, kind: input, shape index: {}]
  %s2 = inlined_call_operand.hbm [shape: f32[96,288], index: 2, kind: input, shape index: {}]
  %s3 = inlined_call_operand.hbm [shape: f32[96,96], index: 3, kind: input, shape index: {}]
  %s4 = inlined_call_operand.vmem [shape: f32[2,8,128], index: 4, kind: input, shape index: {}]
  %s5 = inlined_call_operand.vmem [shape: f32[96,512], index: 5, kind: input, shape index: {}]
  %s6 = inlined_call_operand.vmem [shape: f32[256,96], index: 6, kind: input, shape index: {}]
  %s7 = inlined_call_operand.hbm [shape: f32[2,8,96], index: 7, kind: output, shape index: {}]
  %s8 = sld [smem:[#allocation0]]
  $region106: #{tpu_custom_call.1} parent=0
    _
  %s10 = ssub.s32 1, %s8
  %s11 = scalar_select 0, %s10, %s8
  $region1: #{tpu_custom_call.1} parent=0
    #allocation5 [shape = 'u8[147456]{0}', space=vmem, size = 0x24000, scoped, tag = 'input window, operand 2, single buffered']
    #allocation6 [shape = 's32[1]{0}', space=sflag, size = 0x4, scoped, tag = 'scoped memory for tpu_custom_call.1']
    #allocation7 [shape = 's32[1]{0}', space=sflag, size = 0x4, scoped, tag = 'scoped memory for tpu_custom_call.1']
    #allocation8 [shape = 'u8[49152]{0}', space=vmem, size = 0xc000, scoped, tag = 'input window, operand 3, single buffered']
    #allocation9 [shape = 's32[1]{0}', space=sflag, size = 0x4, scoped, tag = 'scoped memory for tpu_custom_call.1']
    #allocation10 [shape = 'u8[8192]{0}', space=vmem, size = 0x2000, scoped, tag = 'output window, operand 0, single buffered']
    %12 = vsyncpa [#allocation6], 0
    %13 = vsyncpa [#allocation9], 0
    %14 = vsyncpa [#allocation7], 0
    // Predicated region
    $region2: #{tpu_custom_call.1} parent=1 // pred_check
      _
    $region3: #{tpu_custom_call.1} parent=1 // pred_check_branch
      %16 = sbr.rel (0) target = $region5
    $region4: #{tpu_custom_call.1} parent=1 // pred_region
      _
    $region5: #{tpu_custom_call.1} parent=1 // pred_fallthru
      _
    // Predicated region
    $region6: #{tpu_custom_call.1} parent=1 // pred_check
      _
    $region7: #{tpu_custom_call.1} parent=1 // pred_check_branch
      %18 = sbr.rel (0) target = $region9
    $region8: #{tpu_custom_call.1} parent=1 // pred_region
      _
    $region9: #{tpu_custom_call.1} parent=1 // pred_fallthru
      _
    // Predicated region
    $region10: #{tpu_custom_call.1} parent=1 // pred_check
      _
    $region11: #{tpu_custom_call.1} parent=1 // pred_check_branch
      %20 = sbr.rel (0) target = $region13
    $region12: #{tpu_custom_call.1} parent=1 // pred_region
      %s22 = ssub.s32 4608, 4608
      %23 = vsyncadd [#allocation6], %s22
      %s24 = sshll.u32 [#allocation5], 4
      %s25 = int_to_ptr.vmem [resolvable:$true] %s24
      %30 = dma.hbm_to_vmem [thread:$0]  %s2, 4608, %s25, [#allocation6], 384, 384, 24
    $region13: #{tpu_custom_call.1} parent=1 // pred_fallthru
      _
    // Predicated region
    $region14: #{tpu_custom_call.1} parent=1 // pred_check
      _
    $region15: #{tpu_custom_call.1} parent=1 // pred_check_branch
      %32 = sbr.rel (0) target = $region17
    $region16: #{tpu_custom_call.1} parent=1 // pred_region
      %s34 = ssub.s32 1536, 1536
      %35 = vsyncadd [#allocation9], %s34
      %s36 = sshll.u32 [#allocation8], 4
      %s37 = int_to_ptr.vmem [resolvable:$true] %s36
      %42 = dma.hbm_to_vmem [thread:$0]  %s3, 1536, %s37, [#allocation9], 128, 128, 8
    $region17: #{tpu_custom_call.1} parent=1 // pred_fallthru
      _
    // Predicated region
    $region18: #{tpu_custom_call.1} parent=1 // pred_check
      _
    $region19: #{tpu_custom_call.1} parent=1 // pred_check_branch
      %44 = sbr.rel (0) target = $region21
    $region20: #{tpu_custom_call.1} parent=1 // pred_region
      _
    $region21: #{tpu_custom_call.1} parent=1 // pred_fallthru
      _
    // Predicated region
    $region22: #{tpu_custom_call.1} parent=1 // pred_check
      _
    $region23: #{tpu_custom_call.1} parent=1 // pred_check_branch
      %46 = sbr.rel (0) target = $region25
    $region24: #{tpu_custom_call.1} parent=1 // pred_region
      %47 = dma.done [#allocation6], 4608
    $region25: #{tpu_custom_call.1} parent=1 // pred_fallthru
      _
    // Predicated region
    $region26: #{tpu_custom_call.1} parent=1 // pred_check
      _
    $region27: #{tpu_custom_call.1} parent=1 // pred_check_branch
      %49 = sbr.rel (0) target = $region29
    $region28: #{tpu_custom_call.1} parent=1 // pred_region
      %50 = dma.done [#allocation9], 1536
    $region29: #{tpu_custom_call.1} parent=1 // pred_fallthru
      _
    %p52 = scmp.lt.u32.totalorder 384, 8
    %p53 = pneg %p52
    // Predicated region
    $region30: #{tpu_custom_call.1} parent=1 // pred_check
      _
    $region31: #{tpu_custom_call.1} parent=1 // pred_check_branch
      %55 = sbr.rel (%p52) target = $region33
    $region32: #{tpu_custom_call.1} parent=1 // pred_region
      %s71 = sand.u32 384, 7
      %p72 = scmp.eq.s32.totalorder %s71, 0
      // Predicated region
      $region45: #{tpu_custom_call.1} parent=32 // pred_check
        %p73 = pneg %p72
      $region46: #{tpu_custom_call.1} parent=32 // pred_check_branch
        %75 = sbr.rel (%p73) target = $region48
      $region47: #{tpu_custom_call.1} parent=32 // pred_region
        loop: start=0, step=1, limit=1
        $region49: #{tpu_custom_call.1} parent=47 // loop_pre_header
          _
        $region50: #{tpu_custom_call.1} parent=47 // loop_header
          %s77 = sphi 0, %s81
          %p78 = scmp.ge.s32.totalorder %s77, 1
          %s82 = sphi %s5, %s5
          %s83 = sphi [#allocation2], [#allocation2]
        $region51: #{tpu_custom_call.1} parent=47 // loop_header_branch
          %80 = sbr.rel (%p78) target = $region55
        $region52: #{tpu_custom_call.1} parent=47 // loop_body
          %v84 = vld [vmem:[%s82] sm:$0xff]
          %85 = vst [vmem:[%s83] sm:$0xff] %v84
          %v86 = vld [vmem:[%s82 + $0x8] sm:$0xff]
          %87 = vst [vmem:[%s83 + $0x8] sm:$0xff] %v86
          %v88 = vld [vmem:[%s82 + $0x10] sm:$0xff]
          %89 = vst [vmem:[%s83 + $0x10] sm:$0xff] %v88
          %v90 = vld [vmem:[%s82 + $0x18] sm:$0xff]
          %91 = vst [vmem:[%s83 + $0x18] sm:$0xff] %v90
          %v92 = vld [vmem:[%s82 + $0x20] sm:$0xff]
          %93 = vst [vmem:[%s83 + $0x20] sm:$0xff] %v92
          %v94 = vld [vmem:[%s82 + $0x28] sm:$0xff]
          %95 = vst [vmem:[%s83 + $0x28] sm:$0xff] %v94
          %v96 = vld [vmem:[%s82 + $0x30] sm:$0xff]
          %97 = vst [vmem:[%s83 + $0x30] sm:$0xff] %v96
          %v98 = vld [vmem:[%s82 + $0x38] sm:$0xff]
          %99 = vst [vmem:[%s83 + $0x38] sm:$0xff] %v98
          %v100 = vld [vmem:[%s82 + $0x40] sm:$0xff]
          %101 = vst [vmem:[%s83 + $0x40] sm:$0xff] %v100
          %v102 = vld [vmem:[%s82 + $0x48] sm:$0xff]
          %103 = vst [vmem:[%s83 + $0x48] sm:$0xff] %v102
          %v104 = vld [vmem:[%s82 + $0x50] sm:$0xff]
          %105 = vst [vmem:[%s83 + $0x50] sm:$0xff] %v104
          %v106 = vld [vmem:[%s82 + $0x58] sm:$0xff]
          %107 = vst [vmem:[%s83 + $0x58] sm:$0xff] %v106
          %v108 = vld [vmem:[%s82 + $0x60] sm:$0xff]
          %109 = vst [vmem:[%s83 + $0x60] sm:$0xff] %v108
          %v110 = vld [vmem:[%s82 + $0x68] sm:$0xff]
          %111 = vst [vmem:[%s83 + $0x68] sm:$0xff] %v110
          %v112 = vld [vmem:[%s82 + $0x70] sm:$0xff]
          %113 = vst [vmem:[%s83 + $0x70] sm:$0xff] %v112
          %v114 = vld [vmem:[%s82 + $0x78] sm:$0xff]
          %115 = vst [vmem:[%s83 + $0x78] sm:$0xff] %v114
          %v116 = vld [vmem:[%s82 + $0x80] sm:$0xff]
          %117 = vst [vmem:[%s83 + $0x80] sm:$0xff] %v116
          %v118 = vld [vmem:[%s82 + $0x88] sm:$0xff]
          %119 = vst [vmem:[%s83 + $0x88] sm:$0xff] %v118
          %v120 = vld [vmem:[%s82 + $0x90] sm:$0xff]
          %121 = vst [vmem:[%s83 + $0x90] sm:$0xff] %v120
          %v122 = vld [vmem:[%s82 + $0x98] sm:$0xff]
          %123 = vst [vmem:[%s83 + $0x98] sm:$0xff] %v122
          %v124 = vld [vmem:[%s82 + $0xa0] sm:$0xff]
          %125 = vst [vmem:[%s83 + $0xa0] sm:$0xff] %v124
          %v126 = vld [vmem:[%s82 + $0xa8] sm:$0xff]
          %127 = vst [vmem:[%s83 + $0xa8] sm:$0xff] %v126
          %v128 = vld [vmem:[%s82 + $0xb0] sm:$0xff]
          %129 = vst [vmem:[%s83 + $0xb0] sm:$0xff] %v128
          %v130 = vld [vmem:[%s82 + $0xb8] sm:$0xff]
          %131 = vst [vmem:[%s83 + $0xb8] sm:$0xff] %v130
          %v132 = vld [vmem:[%s82 + $0xc0] sm:$0xff]
          %133 = vst [vmem:[%s83 + $0xc0] sm:$0xff] %v132
          %v134 = vld [vmem:[%s82 + $0xc8] sm:$0xff]
          %135 = vst [vmem:[%s83 + $0xc8] sm:$0xff] %v134
          %v136 = vld [vmem:[%s82 + $0xd0] sm:$0xff]
          %137 = vst [vmem:[%s83 + $0xd0] sm:$0xff] %v136
          %v138 = vld [vmem:[%s82 + $0xd8] sm:$0xff]
          %139 = vst [vmem:[%s83 + $0xd8] sm:$0xff] %v138
          %v140 = vld [vmem:[%s82 + $0xe0] sm:$0xff]
          %141 = vst [vmem:[%s83 + $0xe0] sm:$0xff] %v140
          %v142 = vld [vmem:[%s82 + $0xe8] sm:$0xff]
          %143 = vst [vmem:[%s83 + $0xe8] sm:$0xff] %v142
          %v144 = vld [vmem:[%s82 + $0xf0] sm:$0xff]
          %145 = vst [vmem:[%s83 + $0xf0] sm:$0xff] %v144
          %v146 = vld [vmem:[%s82 + $0xf8] sm:$0xff]
          %147 = vst [vmem:[%s83 + $0xf8] sm:$0xff] %v146
          %v148 = vld [vmem:[%s82 + $0x100] sm:$0xff]
          %149 = vst [vmem:[%s83 + $0x100] sm:$0xff] %v148
          %v150 = vld [vmem:[%s82 + $0x108] sm:$0xff]
          %151 = vst [vmem:[%s83 + $0x108] sm:$0xff] %v150
          %v152 = vld [vmem:[%s82 + $0x110] sm:$0xff]
          %153 = vst [vmem:[%s83 + $0x110] sm:$0xff] %v152
          %v154 = vld [vmem:[%s82 + $0x118] sm:$0xff]
          %155 = vst [vmem:[%s83 + $0x118] sm:$0xff] %v154
          %v156 = vld [vmem:[%s82 + $0x120] sm:$0xff]
          %157 = vst [vmem:[%s83 + $0x120] sm:$0xff] %v156
          %v158 = vld [vmem:[%s82 + $0x128] sm:$0xff]
          %159 = vst [vmem:[%s83 + $0x128] sm:$0xff] %v158
          %v160 = vld [vmem:[%s82 + $0x130] sm:$0xff]
          %161 = vst [vmem:[%s83 + $0x130] sm:$0xff] %v160
          %v162 = vld [vmem:[%s82 + $0x138] sm:$0xff]
          %163 = vst [vmem:[%s83 + $0x138] sm:$0xff] %v162
          %v164 = vld [vmem:[%s82 + $0x140] sm:$0xff]
          %165 = vst [vmem:[%s83 + $0x140] sm:$0xff] %v164
          %v166 = vld [vmem:[%s82 + $0x148] sm:$0xff]
          %167 = vst [vmem:[%s83 + $0x148] sm:$0xff] %v166
          %v168 = vld [vmem:[%s82 + $0x150] sm:$0xff]
          %169 = vst [vmem:[%s83 + $0x150] sm:$0xff] %v168
          %v170 = vld [vmem:[%s82 + $0x158] sm:$0xff]
          %171 = vst [vmem:[%s83 + $0x158] sm:$0xff] %v170
          %v172 = vld [vmem:[%s82 + $0x160] sm:$0xff]
          %173 = vst [vmem:[%s83 + $0x160] sm:$0xff] %v172
          %v174 = vld [vmem:[%s82 + $0x168] sm:$0xff]
          %175 = vst [vmem:[%s83 + $0x168] sm:$0xff] %v174
          %v176 = vld [vmem:[%s82 + $0x170] sm:$0xff]
          %177 = vst [vmem:[%s83 + $0x170] sm:$0xff] %v176
          %v178 = vld [vmem:[%s82 + $0x178] sm:$0xff]
          %179 = vst [vmem:[%s83 + $0x178] sm:$0xff] %v178
        $region53: #{tpu_custom_call.1} parent=47 // loop_footer
          %s81 = sadd.s32 1, %s77
        $region54: #{tpu_custom_call.1} parent=47 // loop_footer_branch
          %76 = sbr.rel target = $region50
        $region55: #{tpu_custom_call.1} parent=47 // loop_exit
          _
      $region48: #{tpu_custom_call.1} parent=32 // pred_fallthru
        _
      %p180 = pneg %p72
      // Predicated region
      $region56: #{tpu_custom_call.1} parent=32 // pred_check
        _
      $region57: #{tpu_custom_call.1} parent=32 // pred_check_branch
        %182 = sbr.rel (%p72) target = $region59
      $region58: #{tpu_custom_call.1} parent=32 // pred_region
        %s183 = sand.u32 384, 7
      $region59: #{tpu_custom_call.1} parent=32 // pred_fallthru
        _
    $region33: #{tpu_custom_call.1} parent=1 // pred_fallthru
      _
    // Predicated region
    $region34: #{tpu_custom_call.1} parent=1 // pred_check
      %p56 = pneg %p52
    $region35: #{tpu_custom_call.1} parent=1 // pred_check_branch
      %58 = sbr.rel (%p56) target = $region37
    $region36: #{tpu_custom_call.1} parent=1 // pred_region
      %s59 = sshll.u32 1, 384
      %s60 = ssub.s32 %s59, 1
      loop: start=0, step=1, limit=1
      $region38: #{tpu_custom_call.1} parent=36 // loop_pre_header
        _
      $region39: #{tpu_custom_call.1} parent=36 // loop_header
        %s62 = sphi 0, %s66
        %p63 = scmp.ge.s32.totalorder %s62, 1
        %s67 = sphi %s5, %s5
        %s68 = sphi [#allocation2], [#allocation2]
      $region40: #{tpu_custom_call.1} parent=36 // loop_header_branch
        %65 = sbr.rel (%p63) target = $region44
      $region41: #{tpu_custom_call.1} parent=36 // loop_body
        %v69 = vld [vmem:[%s67] sm:%s60]
        %70 = vst [vmem:[%s68] sm:%s60] %v69
      $region42: #{tpu_custom_call.1} parent=36 // loop_footer
        %s66 = sadd.s32 1, %s62
      $region43: #{tpu_custom_call.1} parent=36 // loop_footer_branch
        %61 = sbr.rel target = $region39
      $region44: #{tpu_custom_call.1} parent=36 // loop_exit
        _
    $region37: #{tpu_custom_call.1} parent=1 // pred_fallthru
      _
    // Predicated region
    $region60: #{tpu_custom_call.1} parent=1 // pred_check
      _
    $region61: #{tpu_custom_call.1} parent=1 // pred_check_branch
      %186 = sbr.rel (0) target = $region63
    $region62: #{tpu_custom_call.1} parent=1 // pred_region
      %187 = vsyncadd [#allocation4], 6144
    $region63: #{tpu_custom_call.1} parent=1 // pred_fallthru
      _
    %s188 = scalar_lea.sflag [#allocation4], 1
    %p190 = scmp.lt.u32.totalorder 256, 8
    %p191 = pneg %p190
    // Predicated region
    $region64: #{tpu_custom_call.1} parent=1 // pred_check
      _
    $region65: #{tpu_custom_call.1} parent=1 // pred_check_branch
      %193 = sbr.rel (%p190) target = $region67
    $region66: #{tpu_custom_call.1} parent=1 // pred_region
      %s209 = sand.u32 256, 7
      %p210 = scmp.eq.s32.totalorder %s209, 0
      // Predicated region
      $region79: #{tpu_custom_call.1} parent=66 // pred_check
        %p211 = pneg %p210
      $region80: #{tpu_custom_call.1} parent=66 // pred_check_branch
        %213 = sbr.rel (%p211) target = $region82
      $region81: #{tpu_custom_call.1} parent=66 // pred_region
        loop: start=0, step=1, limit=1
        $region83: #{tpu_custom_call.1} parent=81 // loop_pre_header
          _
        $region84: #{tpu_custom_call.1} parent=81 // loop_header
          %s215 = sphi 0, %s219
          %p216 = scmp.ge.s32.totalorder %s215, 1
          %s220 = sphi %s6, %s6
          %s221 = sphi [#allocation3], [#allocation3]
        $region85: #{tpu_custom_call.1} parent=81 // loop_header_branch
          %218 = sbr.rel (%p216) target = $region89
        $region86: #{tpu_custom_call.1} parent=81 // loop_body
          %v222 = vld [vmem:[%s220] sm:$0xff]
          %223 = vst [vmem:[%s221] sm:$0xff] %v222
          %v224 = vld [vmem:[%s220 + $0x8] sm:$0xff]
          %225 = vst [vmem:[%s221 + $0x8] sm:$0xff] %v224
          %v226 = vld [vmem:[%s220 + $0x10] sm:$0xff]
          %227 = vst [vmem:[%s221 + $0x10] sm:$0xff] %v226
          %v228 = vld [vmem:[%s220 + $0x18] sm:$0xff]
          %229 = vst [vmem:[%s221 + $0x18] sm:$0xff] %v228
          %v230 = vld [vmem:[%s220 + $0x20] sm:$0xff]
          %231 = vst [vmem:[%s221 + $0x20] sm:$0xff] %v230
          %v232 = vld [vmem:[%s220 + $0x28] sm:$0xff]
          %233 = vst [vmem:[%s221 + $0x28] sm:$0xff] %v232
          %v234 = vld [vmem:[%s220 + $0x30] sm:$0xff]
          %235 = vst [vmem:[%s221 + $0x30] sm:$0xff] %v234
          %v236 = vld [vmem:[%s220 + $0x38] sm:$0xff]
          %237 = vst [vmem:[%s221 + $0x38] sm:$0xff] %v236
          %v238 = vld [vmem:[%s220 + $0x40] sm:$0xff]
          %239 = vst [vmem:[%s221 + $0x40] sm:$0xff] %v238
          %v240 = vld [vmem:[%s220 + $0x48] sm:$0xff]
          %241 = vst [vmem:[%s221 + $0x48] sm:$0xff] %v240
          %v242 = vld [vmem:[%s220 + $0x50] sm:$0xff]
          %243 = vst [vmem:[%s221 + $0x50] sm:$0xff] %v242
          %v244 = vld [vmem:[%s220 + $0x58] sm:$0xff]
          %245 = vst [vmem:[%s221 + $0x58] sm:$0xff] %v244
          %v246 = vld [vmem:[%s220 + $0x60] sm:$0xff]
          %247 = vst [vmem:[%s221 + $0x60] sm:$0xff] %v246
          %v248 = vld [vmem:[%s220 + $0x68] sm:$0xff]
          %249 = vst [vmem:[%s221 + $0x68] sm:$0xff] %v248
          %v250 = vld [vmem:[%s220 + $0x70] sm:$0xff]
          %251 = vst [vmem:[%s221 + $0x70] sm:$0xff] %v250
          %v252 = vld [vmem:[%s220 + $0x78] sm:$0xff]
          %253 = vst [vmem:[%s221 + $0x78] sm:$0xff] %v252
          %v254 = vld [vmem:[%s220 + $0x80] sm:$0xff]
          %255 = vst [vmem:[%s221 + $0x80] sm:$0xff] %v254
          %v256 = vld [vmem:[%s220 + $0x88] sm:$0xff]
          %257 = vst [vmem:[%s221 + $0x88] sm:$0xff] %v256
          %v258 = vld [vmem:[%s220 + $0x90] sm:$0xff]
          %259 = vst [vmem:[%s221 + $0x90] sm:$0xff] %v258
          %v260 = vld [vmem:[%s220 + $0x98] sm:$0xff]
          %261 = vst [vmem:[%s221 + $0x98] sm:$0xff] %v260
          %v262 = vld [vmem:[%s220 + $0xa0] sm:$0xff]
          %263 = vst [vmem:[%s221 + $0xa0] sm:$0xff] %v262
          %v264 = vld [vmem:[%s220 + $0xa8] sm:$0xff]
          %265 = vst [vmem:[%s221 + $0xa8] sm:$0xff] %v264
          %v266 = vld [vmem:[%s220 + $0xb0] sm:$0xff]
          %267 = vst [vmem:[%s221 + $0xb0] sm:$0xff] %v266
          %v268 = vld [vmem:[%s220 + $0xb8] sm:$0xff]
          %269 = vst [vmem:[%s221 + $0xb8] sm:$0xff] %v268
          %v270 = vld [vmem:[%s220 + $0xc0] sm:$0xff]
          %271 = vst [vmem:[%s221 + $0xc0] sm:$0xff] %v270
          %v272 = vld [vmem:[%s220 + $0xc8] sm:$0xff]
          %273 = vst [vmem:[%s221 + $0xc8] sm:$0xff] %v272
          %v274 = vld [vmem:[%s220 + $0xd0] sm:$0xff]
          %275 = vst [vmem:[%s221 + $0xd0] sm:$0xff] %v274
          %v276 = vld [vmem:[%s220 + $0xd8] sm:$0xff]
          %277 = vst [vmem:[%s221 + $0xd8] sm:$0xff] %v276
          %v278 = vld [vmem:[%s220 + $0xe0] sm:$0xff]
          %279 = vst [vmem:[%s221 + $0xe0] sm:$0xff] %v278
          %v280 = vld [vmem:[%s220 + $0xe8] sm:$0xff]
          %281 = vst [vmem:[%s221 + $0xe8] sm:$0xff] %v280
          %v282 = vld [vmem:[%s220 + $0xf0] sm:$0xff]
          %283 = vst [vmem:[%s221 + $0xf0] sm:$0xff] %v282
          %v284 = vld [vmem:[%s220 + $0xf8] sm:$0xff]
          %285 = vst [vmem:[%s221 + $0xf8] sm:$0xff] %v284
        $region87: #{tpu_custom_call.1} parent=81 // loop_footer
          %s219 = sadd.s32 1, %s215
        $region88: #{tpu_custom_call.1} parent=81 // loop_footer_branch
          %214 = sbr.rel target = $region84
        $region89: #{tpu_custom_call.1} parent=81 // loop_exit
          _
      $region82: #{tpu_custom_call.1} parent=66 // pred_fallthru
        _
      %p286 = pneg %p210
      // Predicated region
      $region90: #{tpu_custom_call.1} parent=66 // pred_check
        _
      $region91: #{tpu_custom_call.1} parent=66 // pred_check_branch
        %288 = sbr.rel (%p210) target = $region93
      $region92: #{tpu_custom_call.1} parent=66 // pred_region
        %s289 = sand.u32 256, 7
      $region93: #{tpu_custom_call.1} parent=66 // pred_fallthru
        _
    $region67: #{tpu_custom_call.1} parent=1 // pred_fallthru
      _
    // Predicated region
    $region68: #{tpu_custom_call.1} parent=1 // pred_check
      %p194 = pneg %p190
    $region69: #{tpu_custom_call.1} parent=1 // pred_check_branch
      %196 = sbr.rel (%p194) target = $region71
    $region70: #{tpu_custom_call.1} parent=1 // pred_region
      %s197 = sshll.u32 1, 256
      %s198 = ssub.s32 %s197, 1
      loop: start=0, step=1, limit=1
      $region72: #{tpu_custom_call.1} parent=70 // loop_pre_header
        _
      $region73: #{tpu_custom_call.1} parent=70 // loop_header
        %s200 = sphi 0, %s204
        %p201 = scmp.ge.s32.totalorder %s200, 1
        %s205 = sphi %s6, %s6
        %s206 = sphi [#allocation3], [#allocation3]
      $region74: #{tpu_custom_call.1} parent=70 // loop_header_branch
        %203 = sbr.rel (%p201) target = $region78
      $region75: #{tpu_custom_call.1} parent=70 // loop_body
        %v207 = vld [vmem:[%s205] sm:%s198]
        %208 = vst [vmem:[%s206] sm:%s198] %v207
      $region76: #{tpu_custom_call.1} parent=70 // loop_footer
        %s204 = sadd.s32 1, %s200
      $region77: #{tpu_custom_call.1} parent=70 // loop_footer_branch
        %199 = sbr.rel target = $region73
      $region78: #{tpu_custom_call.1} parent=70 // loop_exit
        _
    $region71: #{tpu_custom_call.1} parent=1 // pred_fallthru
      _
    // Predicated region
    $region94: #{tpu_custom_call.1} parent=1 // pred_check
      _
    $region95: #{tpu_custom_call.1} parent=1 // pred_check_branch
      %292 = sbr.rel (0) target = $region97
    $region96: #{tpu_custom_call.1} parent=1 // pred_region
      %293 = vsyncadd %s188, 4096
    $region97: #{tpu_custom_call.1} parent=1 // pred_fallthru
      _
    %v294 = vld [vmem:[%s0] sm:$0xff]
    %v295 = vld [vmem:[%s0 + $0x8] sm:$0xff]
    %v296 = vld [vmem:[%s1] sm:$0x3]
    %v297 = vmul.f32 %v294, %v294
    %v298 = vmul.f32 %v295, %v295
    %vm299 = vcmask 785408
    %v300 = vsel %vm299, %v297, 0.0
    %301 = vadd.xlane.f32.xlu0 %v300
    %v302 = vpop.xlane.xlu0 %301
    %v303 = vsel %vm299, %v298, 0.0
    %304 = vadd.xlane.f32.xlu0 %v303
    %v305 = vpop.xlane.xlu0 %304
    %v306 = vmul.f32 %v302, 0.010416667
    %v307 = vmul.f32 %v305, 0.010416667
    %v308 = vadd.f32 %v306, 1e-06
    %v309 = vadd.f32 %v307, 1e-06
    %v310 = vrsqrt.pop %v308
    %v311 = vrsqrt.pop %v309
    %v312 = vmul.f32 %v294, %v310
    %v313 = vmul.f32 %v295, %v311
    %v314 = vlaneseq
    %v315 = vshrl.u32 %v314, 7
    %v316 = vsub.s32 0, %v315
    %v317 = vrot.slane %v296, %v316
    %v318 = vmul.f32 %v312, %v317
    %v319 = vmul.f32 %v313, %v317
    %v320 = vld [vmem:[#allocation5] sm:$0xff]
    %v321 = vld [vmem:[#allocation5 + $0x8] sm:$0xff]
    %v322 = vld [vmem:[#allocation5 + $0x10] sm:$0xff]
    %v323 = vld [vmem:[#allocation5 + $0x18] sm:$0xff]
    %v324 = vld [vmem:[#allocation5 + $0x20] sm:$0xff]
    %v325 = vld [vmem:[#allocation5 + $0x28] sm:$0xff]
    %v326 = vld [vmem:[#allocation5 + $0x30] sm:$0xff]
    %v327 = vld [vmem:[#allocation5 + $0x38] sm:$0xff]
    %v328 = vld [vmem:[#allocation5 + $0x40] sm:$0xff]
    %v329 = vld [vmem:[#allocation5 + $0x48] sm:$0xff]
    %v330 = vld [vmem:[#allocation5 + $0x50] sm:$0xff]
    %v331 = vld [vmem:[#allocation5 + $0x58] sm:$0xff]
    %v332 = vld [vmem:[#allocation5 + $0x60] sm:$0xff]
    %v333 = vld [vmem:[#allocation5 + $0x68] sm:$0xff]
    %v334 = vld [vmem:[#allocation5 + $0x70] sm:$0xff]
    %v335 = vld [vmem:[#allocation5 + $0x78] sm:$0xff]
    %v336 = vld [vmem:[#allocation5 + $0x80] sm:$0xff]
    %v337 = vld [vmem:[#allocation5 + $0x88] sm:$0xff]
    %v338 = vld [vmem:[#allocation5 + $0x90] sm:$0xff]
    %v339 = vld [vmem:[#allocation5 + $0x98] sm:$0xff]
    %v340 = vld [vmem:[#allocation5 + $0xa0] sm:$0xff]
    %v341 = vld [vmem:[#allocation5 + $0xa8] sm:$0xff]
    %v342 = vld [vmem:[#allocation5 + $0xb0] sm:$0xff]
    %v343 = vld [vmem:[#allocation5 + $0xb8] sm:$0xff]
    %v344 = vld [vmem:[#allocation5 + $0xc0] sm:$0xff]
    %v345 = vld [vmem:[#allocation5 + $0xc8] sm:$0xff]
    %v346 = vld [vmem:[#allocation5 + $0xd0] sm:$0xff]
    %v347 = vld [vmem:[#allocation5 + $0xd8] sm:$0xff]
    %v348 = vld [vmem:[#allocation5 + $0xe0] sm:$0xff]
    %v349 = vld [vmem:[#allocation5 + $0xe8] sm:$0xff]
    %v350 = vld [vmem:[#allocation5 + $0xf0] sm:$0xff]
    %v351 = vld [vmem:[#allocation5 + $0xf8] sm:$0xff]
    %v352 = vld [vmem:[#allocation5 + $0x100] sm:$0xff]
    %v353 = vld [vmem:[#allocation5 + $0x108] sm:$0xff]
    %v354 = vld [vmem:[#allocation5 + $0x110] sm:$0xff]
    %v355 = vld [vmem:[#allocation5 + $0x118] sm:$0xff]
    %v357 = vsel %vm299, %v318, 0
    %v360 = vsel %vm299, %v319, 0
    %362 = vmatprep.subr.mxu0 0.0
    %363 = vmatpush1.msra.mxu0 0.0
    %364 = vmatprep.subr.mxu0 0.0
    %365 = vmatpush1.msra.mxu0 0.0
    %366 = vmatprep.subr.mxu0 0.0
    %367 = vmatpush1.msra.mxu0 0.0
    %368 = vmatprep.subr.mxu0 0.0
    %369 = vmatpush1.msra.mxu0 0.0
    %370 = vmatprep.subr.mxu0 %v354
    %371 = vmatpush1.msra.mxu0 %v353
    %372 = vmatprep.subr.mxu0 %v351
    %373 = vmatpush1.msra.mxu0 %v350
    %374 = vmatprep.subr.mxu0 %v348
    %375 = vmatpush1.msra.mxu0 %v347
    %376 = vmatprep.subr.mxu0 %v345
    %377 = vmatpush1.msra.mxu0 %v344
    %378 = vmatprep.subr.mxu0 %v342
    %379 = vmatpush1.msra.mxu0 %v341
    %380 = vmatprep.subr.mxu0 %v339
    %381 = vmatpush1.msra.mxu0 %v338
    %382 = vmatprep.subr.mxu0 %v336
    %383 = vmatpush1.msra.mxu0 %v335
    %384 = vmatprep.subr.mxu0 %v333
    %385 = vmatpush1.msra.mxu0 %v332
    %386 = vmatprep.subr.mxu0 %v330
    %387 = vmatpush1.msra.mxu0 %v329
    %388 = vmatprep.subr.mxu0 %v327
    %389 = vmatpush1.msra.mxu0 %v326
    %390 = vmatprep.subr.mxu0 %v324
    %391 = vmatpush1.msra.mxu0 %v323
    %392 = vmatprep.subr.mxu0 %v321
    %393 = vmatpush1.msra.mxu0 %v320
    %394 = vmatprep.subr.mxu0 0.0
    %395 = vmatpush2.msra.mxu0 0.0
    %396 = vmatprep.subr.mxu0 0.0
    %397 = vmatpush2.msra.mxu0 0.0
    %398 = vmatprep.subr.mxu0 0.0
    %399 = vmatpush2.msra.mxu0 0.0
    %400 = vmatprep.subr.mxu0 0.0
    %401 = vmatpush2.msra.mxu0 0.0
    %402 = vmatprep.subr.mxu0 0.0
    %403 = vmatpush2.msra.mxu0 0.0
    %404 = vmatprep.subr.mxu0 0.0
    %405 = vmatpush2.msra.mxu0 0.0
    %406 = vmatprep.subr.mxu0 0.0
    %407 = vmatpush2.msra.mxu0 0.0
    %408 = vmatprep.subr.mxu0 0.0
    %409 = vmatpush2.msra.mxu0 0.0
    %410 = vmatprep.subr.mxu0 0.0
    %411 = vmatpush2.msra.mxu0 0.0
    %412 = vmatprep.subr.mxu0 0.0
    %413 = vmatpush2.msra.mxu0 0.0
    %414 = vmatprep.subr.mxu0 0.0
    %415 = vmatpush2.msra.mxu0 0.0
    %416 = vmatprep.subr.mxu0 0.0
    %417 = vmatpush2.msra.mxu0 0.0
    %418 = vmatprep.subr.mxu0 0.0
    %419 = vmatpush2.msra.mxu0 0.0
    %420 = vmatprep.subr.mxu0 0.0
    %421 = vmatpush2.msra.mxu0 0.0
    %422 = vmatprep.subr.mxu0 0.0
    %423 = vmatpush2.msra.mxu0 0.0
    %424 = vmatprep.subr.mxu0 0.0
    %425 = vmatpush2.msra.mxu0 0.0
    %426 = vmatprep.mubr.f32.mxu0 0.0
    %427 = vmatmul.mubr.f32.gmra.mxu0 %v357
    %v428 = vpop.f32.mrf.mxu0
    %v429 = vadd.f32 0.0, %v428
    %v430 = vpop.f32.mrf.mxu0
    %v431 = vadd.f32 0.0, %v430
    %432 = vmatprep.mubr.f32.mxu0 0.0
    %433 = vmatmul.mubr.f32.gmra.mxu0 %v360
    %v434 = vpop.f32.mrf.mxu0
    %v435 = vadd.f32 0.0, %v434
    %v436 = vpop.f32.mrf.mxu0
    %v437 = vadd.f32 0.0, %v436
    %438 = vdwg.mxu0
    %439 = vmatprep.subr.mxu0 0.0
    %440 = vmatpush1.msra.mxu0 0.0
    %441 = vmatprep.subr.mxu0 0.0
    %442 = vmatpush1.msra.mxu0 0.0
    %443 = vmatprep.subr.mxu0 0.0
    %444 = vmatpush1.msra.mxu0 0.0
    %445 = vmatprep.subr.mxu0 0.0
    %446 = vmatpush1.msra.mxu0 0.0
    %447 = vmatprep.subr.mxu0 0.0
    %448 = vmatpush1.msra.mxu0 %v355
    %449 = vmatprep.subr.mxu0 0.0
    %450 = vmatpush1.msra.mxu0 %v352
    %451 = vmatprep.subr.mxu0 0.0
    %452 = vmatpush1.msra.mxu0 %v349
    %453 = vmatprep.subr.mxu0 0.0
    %454 = vmatpush1.msra.mxu0 %v346
    %455 = vmatprep.subr.mxu0 0.0
    %456 = vmatpush1.msra.mxu0 %v343
    %457 = vmatprep.subr.mxu0 0.0
    %458 = vmatpush1.msra.mxu0 %v340
    %459 = vmatprep.subr.mxu0 0.0
    %460 = vmatpush1.msra.mxu0 %v337
    %461 = vmatprep.subr.mxu0 0.0
    %462 = vmatpush1.msra.mxu0 %v334
    %463 = vmatprep.subr.mxu0 0.0
    %464 = vmatpush1.msra.mxu0 %v331
    %465 = vmatprep.subr.mxu0 0.0
    %466 = vmatpush1.msra.mxu0 %v328
    %467 = vmatprep.subr.mxu0 0.0
    %468 = vmatpush1.msra.mxu0 %v325
    %469 = vmatprep.subr.mxu0 0.0
    %470 = vmatpush1.msra.mxu0 %v322
    %471 = vmatprep.subr.mxu0 0.0
    %472 = vmatpush2.msra.mxu0 0.0
    %473 = vmatprep.subr.mxu0 0.0
    %474 = vmatpush2.msra.mxu0 0.0
    %475 = vmatprep.subr.mxu0 0.0
    %476 = vmatpush2.msra.mxu0 0.0
    %477 = vmatprep.subr.mxu0 0.0
    %478 = vmatpush2.msra.mxu0 0.0
    %479 = vmatprep.subr.mxu0 0.0
    %480 = vmatpush2.msra.mxu0 0.0
    %481 = vmatprep.subr.mxu0 0.0
    %482 = vmatpush2.msra.mxu0 0.0
    %483 = vmatprep.subr.mxu0 0.0
    %484 = vmatpush2.msra.mxu0 0.0
    %485 = vmatprep.subr.mxu0 0.0
    %486 = vmatpush2.msra.mxu0 0.0
    %487 = vmatprep.subr.mxu0 0.0
    %488 = vmatpush2.msra.mxu0 0.0
    %489 = vmatprep.subr.mxu0 0.0
    %490 = vmatpush2.msra.mxu0 0.0
    %491 = vmatprep.subr.mxu0 0.0
    %492 = vmatpush2.msra.mxu0 0.0
    %493 = vmatprep.subr.mxu0 0.0
    %494 = vmatpush2.msra.mxu0 0.0
    %495 = vmatprep.subr.mxu0 0.0
    %496 = vmatpush2.msra.mxu0 0.0
    %497 = vmatprep.subr.mxu0 0.0
    %498 = vmatpush2.msra.mxu0 0.0
    %499 = vmatprep.subr.mxu0 0.0
    %500 = vmatpush2.msra.mxu0 0.0
    %501 = vmatprep.subr.mxu0 0.0
    %502 = vmatpush2.msra.mxu0 0.0
    %503 = vmatprep.mubr.f32.mxu0 0.0
    %504 = vmatmul.mubr.f32.gmra.mxu0 %v357
    %v505 = vpop.f32.mrf.mxu0
    %v506 = vadd.f32 0.0, %v505
    %v507 = vpop.f32.mrf.mxu0
    %508 = vmatprep.mubr.f32.mxu0 0.0
    %509 = vmatmul.mubr.f32.gmra.mxu0 %v360
    %v510 = vpop.f32.mrf.mxu0
    %v511 = vadd.f32 0.0, %v510
    %v512 = vpop.f32.mrf.mxu0
    %513 = vdwg.mxu0
    %v514 = vld [vmem:[%s4] sm:$0xff]
    %v515 = vld [vmem:[%s4 + $0x8] sm:$0xff]
    %v516 = vmul.f32 %v429, %v514
    %v517 = vmul.f32 %v435, %v514
    %v518 = vmul.f32 %v431, %v515
    %v519 = vmul.f32 %v437, %v515
    %v520 = vadd.f32 %v516, %v518
    %v521 = vadd.f32 %v517, %v519
    %524 = vrot.lane.b32.xlu0 %v520, 112
    %v525 = vpop.permute.xlu0 %524
    %526 = vrot.lane.b32.xlu0 %v521, 112
    %v527 = vpop.permute.xlu0 %526
    %528 = vrot.lane.b32.xlu0 %v520, 96
    %v529 = vpop.permute.xlu0 %528
    %530 = vrot.lane.b32.xlu0 %v521, 96
    %v531 = vpop.permute.xlu0 %530
    %532 = vrot.lane.b32.xlu0 %v520, 80
    %v533 = vpop.permute.xlu0 %532
    %534 = vrot.lane.b32.xlu0 %v521, 80
    %v535 = vpop.permute.xlu0 %534
    %536 = vrot.lane.b32.xlu0 %v520, 64
    %v537 = vpop.permute.xlu0 %536
    %538 = vrot.lane.b32.xlu0 %v521, 64
    %v539 = vpop.permute.xlu0 %538
    %540 = vrot.lane.b32.xlu0 %v520, 48
    %v541 = vpop.permute.xlu0 %540
    %542 = vrot.lane.b32.xlu0 %v521, 48
    %v543 = vpop.permute.xlu0 %542
    %546 = vrot.lane.b32.xlu0 %v506, 112
    %v547 = vpop.permute.xlu0 %546
    %548 = vrot.lane.b32.xlu0 %v511, 112
    %v549 = vpop.permute.xlu0 %548
    %552 = vrot.lane.b32.xlu0 %v520, 32
    %v553 = vpop.permute.xlu0 %552
    %vm554 = vcmask 130048
    %v555 = vsel %vm554, %v520, 0
    %v557 = vsel %vm554, %v525, 0
    %v559 = vsel %vm554, %v529, 0
    %v561 = vsel %vm554, %v553, 0
    %563 = vmatprep.subr.mxu0 0.0
    %564 = vmatpush1.xpose.msra.mxu0 0.0
    %565 = vmatprep.subr.mxu0 0.0
    %566 = vmatpush1.xpose.msra.mxu0 0.0
    %567 = vmatprep.subr.mxu0 0.0
    %568 = vmatpush1.xpose.msra.mxu0 0.0
    %569 = vmatprep.subr.mxu0 0.0
    %570 = vmatpush1.xpose.msra.mxu0 0.0
    %571 = vmatprep.subr.mxu0 0.0
    %572 = vmatpush1.xpose.msra.mxu0 0.0
    %573 = vmatprep.subr.mxu0 0.0
    %574 = vmatpush1.xpose.msra.mxu0 0.0
    %575 = vmatprep.subr.mxu0 0.0
    %576 = vmatpush1.xpose.msra.mxu0 0.0
    %577 = vmatprep.subr.mxu0 0.0
    %578 = vmatpush1.xpose.msra.mxu0 0.0
    %579 = vmatprep.subr.mxu0 0.0
    %580 = vmatpush1.xpose.msra.mxu0 0.0
    %581 = vmatprep.subr.mxu0 0.0
    %582 = vmatpush1.xpose.msra.mxu0 0.0
    %583 = vmatprep.subr.mxu0 0.0
    %584 = vmatpush1.xpose.msra.mxu0 0.0
    %585 = vmatprep.subr.mxu0 0.0
    %586 = vmatpush1.xpose.msra.mxu0 0.0
    %587 = vmatprep.subr.mxu0 0.0
    %588 = vmatpush1.xpose.msra.mxu0 0.0
    %589 = vmatprep.subr.mxu0 0.0
    %590 = vmatpush1.xpose.msra.mxu0 0.0
    %591 = vmatprep.subr.mxu0 0.0
    %592 = vmatpush1.xpose.msra.mxu0 0.0
    %593 = vmatprep.subr.mxu0 0.0
    %594 = vmatpush1.xpose.msra.mxu0 %v561
    %595 = vmatprep.subr.mxu0 0.0
    %596 = vmatpush2.xpose.msra.mxu0 0.0
    %597 = vmatprep.subr.mxu0 0.0
    %598 = vmatpush2.xpose.msra.mxu0 0.0
    %599 = vmatprep.subr.mxu0 0.0
    %600 = vmatpush2.xpose.msra.mxu0 0.0
    %601 = vmatprep.subr.mxu0 0.0
    %602 = vmatpush2.xpose.msra.mxu0 0.0
    %603 = vmatprep.subr.mxu0 0.0
    %604 = vmatpush2.xpose.msra.mxu0 0.0
    %605 = vmatprep.subr.mxu0 0.0
    %606 = vmatpush2.xpose.msra.mxu0 0.0
    %607 = vmatprep.subr.mxu0 0.0
    %608 = vmatpush2.xpose.msra.mxu0 0.0
    %609 = vmatprep.subr.mxu0 0.0
    %610 = vmatpush2.xpose.msra.mxu0 0.0
    %611 = vmatprep.subr.mxu0 0.0
    %612 = vmatpush2.xpose.msra.mxu0 0.0
    %613 = vmatprep.subr.mxu0 0.0
    %614 = vmatpush2.xpose.msra.mxu0 0.0
    %615 = vmatprep.subr.mxu0 0.0
    %616 = vmatpush2.xpose.msra.mxu0 0.0
    %617 = vmatprep.subr.mxu0 0.0
    %618 = vmatpush2.xpose.msra.mxu0 0.0
    %619 = vmatprep.subr.mxu0 0.0
    %620 = vmatpush2.xpose.msra.mxu0 0.0
    %621 = vmatprep.subr.mxu0 0.0
    %622 = vmatpush2.xpose.msra.mxu0 0.0
    %623 = vmatprep.subr.mxu0 0.0
    %624 = vmatpush2.xpose.msra.mxu0 0.0
    %625 = vmatprep.subr.mxu0 0.0
    %626 = vmatpush2.xpose.msra.mxu0 0.0
    %627 = vmatprep.mubr.f32.mxu0 0.0
    %628 = vmatmul.mubr.f32.gmra.mxu0 %v555
    %v629 = vpop.f32.mrf.mxu0
    %v630 = vadd.f32 0.0, %v629
    %v631 = vpop.f32.mrf.mxu0
    %632 = vmatprep.mubr.f32.mxu0 0.0
    %633 = vmatmul.mubr.f32.gmra.mxu0 %v557
    %v634 = vpop.f32.mrf.mxu0
    %v635 = vadd.f32 0.0, %v634
    %v636 = vpop.f32.mrf.mxu0
    %637 = vmatprep.mubr.f32.mxu0 0.0
    %638 = vmatmul.mubr.f32.gmra.mxu0 %v559
    %v639 = vpop.f32.mrf.mxu0
    %v640 = vadd.f32 0.0, %v639
    %v641 = vpop.f32.mrf.mxu0
    %642 = vdwg.mxu0
    %643 = vrot.lane.b32.xlu0 %v525, 32
    %v644 = vpop.permute.xlu0 %643
    %v645 = vsel %vm554, %v533, 0
    %v647 = vsel %vm554, %v537, 0
    %v649 = vsel %vm554, %v541, 0
    %v651 = vsel %vm554, %v644, 0
    %653 = vmatprep.subr.mxu0 0.0
    %654 = vmatpush1.xpose.msra.mxu0 0.0
    %655 = vmatprep.subr.mxu0 0.0
    %656 = vmatpush1.xpose.msra.mxu0 0.0
    %657 = vmatprep.subr.mxu0 0.0
    %658 = vmatpush1.xpose.msra.mxu0 0.0
    %659 = vmatprep.subr.mxu0 0.0
    %660 = vmatpush1.xpose.msra.mxu0 0.0
    %661 = vmatprep.subr.mxu0 0.0
    %662 = vmatpush1.xpose.msra.mxu0 0.0
    %663 = vmatprep.subr.mxu0 0.0
    %664 = vmatpush1.xpose.msra.mxu0 0.0
    %665 = vmatprep.subr.mxu0 0.0
    %666 = vmatpush1.xpose.msra.mxu0 0.0
    %667 = vmatprep.subr.mxu0 0.0
    %668 = vmatpush1.xpose.msra.mxu0 0.0
    %669 = vmatprep.subr.mxu0 0.0
    %670 = vmatpush1.xpose.msra.mxu0 0.0
    %671 = vmatprep.subr.mxu0 0.0
    %672 = vmatpush1.xpose.msra.mxu0 0.0
    %673 = vmatprep.subr.mxu0 0.0
    %674 = vmatpush1.xpose.msra.mxu0 0.0
    %675 = vmatprep.subr.mxu0 0.0
    %676 = vmatpush1.xpose.msra.mxu0 0.0
    %677 = vmatprep.subr.mxu0 0.0
    %678 = vmatpush1.xpose.msra.mxu0 0.0
    %679 = vmatprep.subr.mxu0 0.0
    %680 = vmatpush1.xpose.msra.mxu0 0.0
    %681 = vmatprep.subr.mxu0 0.0
    %682 = vmatpush1.xpose.msra.mxu0 0.0
    %683 = vmatprep.subr.mxu0 0.0
    %684 = vmatpush1.xpose.msra.mxu0 %v651
    %685 = vmatprep.subr.mxu0 0.0
    %686 = vmatpush2.xpose.msra.mxu0 0.0
    %687 = vmatprep.subr.mxu0 0.0
    %688 = vmatpush2.xpose.msra.mxu0 0.0
    %689 = vmatprep.subr.mxu0 0.0
    %690 = vmatpush2.xpose.msra.mxu0 0.0
    %691 = vmatprep.subr.mxu0 0.0
    %692 = vmatpush2.xpose.msra.mxu0 0.0
    %693 = vmatprep.subr.mxu0 0.0
    %694 = vmatpush2.xpose.msra.mxu0 0.0
    %695 = vmatprep.subr.mxu0 0.0
    %696 = vmatpush2.xpose.msra.mxu0 0.0
    %697 = vmatprep.subr.mxu0 0.0
    %698 = vmatpush2.xpose.msra.mxu0 0.0
    %699 = vmatprep.subr.mxu0 0.0
    %700 = vmatpush2.xpose.msra.mxu0 0.0
    %701 = vmatprep.subr.mxu0 0.0
    %702 = vmatpush2.xpose.msra.mxu0 0.0
    %703 = vmatprep.subr.mxu0 0.0
    %704 = vmatpush2.xpose.msra.mxu0 0.0
    %705 = vmatprep.subr.mxu0 0.0
    %706 = vmatpush2.xpose.msra.mxu0 0.0
    %707 = vmatprep.subr.mxu0 0.0
    %708 = vmatpush2.xpose.msra.mxu0 0.0
    %709 = vmatprep.subr.mxu0 0.0
    %710 = vmatpush2.xpose.msra.mxu0 0.0
    %711 = vmatprep.subr.mxu0 0.0
    %712 = vmatpush2.xpose.msra.mxu0 0.0
    %713 = vmatprep.subr.mxu0 0.0
    %714 = vmatpush2.xpose.msra.mxu0 0.0
    %715 = vmatprep.subr.mxu0 0.0
    %716 = vmatpush2.xpose.msra.mxu0 0.0
    %717 = vmatprep.mubr.f32.mxu0 0.0
    %718 = vmatmul.mubr.f32.gmra.mxu0 %v645
    %v719 = vpop.f32.mrf.mxu0
    %v720 = vadd.f32 0.0, %v719
    %v721 = vpop.f32.mrf.mxu0
    %722 = vmatprep.mubr.f32.mxu0 0.0
    %723 = vmatmul.mubr.f32.gmra.mxu0 %v647
    %v724 = vpop.f32.mrf.mxu0
    %v725 = vadd.f32 0.0, %v724
    %v726 = vpop.f32.mrf.mxu0
    %727 = vmatprep.mubr.f32.mxu0 0.0
    %728 = vmatmul.mubr.f32.gmra.mxu0 %v649
    %v729 = vpop.f32.mrf.mxu0
    %v730 = vadd.f32 0.0, %v729
    %v731 = vpop.f32.mrf.mxu0
    %732 = vdwg.mxu0
    %733 = vrot.lane.b32.xlu0 %v521, 32
    %v734 = vpop.permute.xlu0 %733
    %v735 = vsel %vm554, %v521, 0
    %v737 = vsel %vm554, %v527, 0
    %v739 = vsel %vm554, %v531, 0
    %v741 = vsel %vm554, %v734, 0
    %743 = vmatprep.subr.mxu0 0.0
    %744 = vmatpush1.xpose.msra.mxu0 0.0
    %745 = vmatprep.subr.mxu0 0.0
    %746 = vmatpush1.xpose.msra.mxu0 0.0
    %747 = vmatprep.subr.mxu0 0.0
    %748 = vmatpush1.xpose.msra.mxu0 0.0
    %749 = vmatprep.subr.mxu0 0.0
    %750 = vmatpush1.xpose.msra.mxu0 0.0
    %751 = vmatprep.subr.mxu0 0.0
    %752 = vmatpush1.xpose.msra.mxu0 0.0
    %753 = vmatprep.subr.mxu0 0.0
    %754 = vmatpush1.xpose.msra.mxu0 0.0
    %755 = vmatprep.subr.mxu0 0.0
    %756 = vmatpush1.xpose.msra.mxu0 0.0
    %757 = vmatprep.subr.mxu0 0.0
    %758 = vmatpush1.xpose.msra.mxu0 0.0
    %759 = vmatprep.subr.mxu0 0.0
    %760 = vmatpush1.xpose.msra.mxu0 0.0
    %761 = vmatprep.subr.mxu0 0.0
    %762 = vmatpush1.xpose.msra.mxu0 0.0
    %763 = vmatprep.subr.mxu0 0.0
    %764 = vmatpush1.xpose.msra.mxu0 0.0
    %765 = vmatprep.subr.mxu0 0.0
    %766 = vmatpush1.xpose.msra.mxu0 0.0
    %767 = vmatprep.subr.mxu0 0.0
    %768 = vmatpush1.xpose.msra.mxu0 0.0
    %769 = vmatprep.subr.mxu0 0.0
    %770 = vmatpush1.xpose.msra.mxu0 0.0
    %771 = vmatprep.subr.mxu0 0.0
    %772 = vmatpush1.xpose.msra.mxu0 0.0
    %773 = vmatprep.subr.mxu0 0.0
    %774 = vmatpush1.xpose.msra.mxu0 %v741
    %775 = vmatprep.subr.mxu0 0.0
    %776 = vmatpush2.xpose.msra.mxu0 0.0
    %777 = vmatprep.subr.mxu0 0.0
    %778 = vmatpush2.xpose.msra.mxu0 0.0
    %779 = vmatprep.subr.mxu0 0.0
    %780 = vmatpush2.xpose.msra.mxu0 0.0
    %781 = vmatprep.subr.mxu0 0.0
    %782 = vmatpush2.xpose.msra.mxu0 0.0
    %783 = vmatprep.subr.mxu0 0.0
    %784 = vmatpush2.xpose.msra.mxu0 0.0
    %785 = vmatprep.subr.mxu0 0.0
    %786 = vmatpush2.xpose.msra.mxu0 0.0
    %787 = vmatprep.subr.mxu0 0.0
    %788 = vmatpush2.xpose.msra.mxu0 0.0
    %789 = vmatprep.subr.mxu0 0.0
    %790 = vmatpush2.xpose.msra.mxu0 0.0
    %791 = vmatprep.subr.mxu0 0.0
    %792 = vmatpush2.xpose.msra.mxu0 0.0
    %793 = vmatprep.subr.mxu0 0.0
    %794 = vmatpush2.xpose.msra.mxu0 0.0
    %795 = vmatprep.subr.mxu0 0.0
    %796 = vmatpush2.xpose.msra.mxu0 0.0
    %797 = vmatprep.subr.mxu0 0.0
    %798 = vmatpush2.xpose.msra.mxu0 0.0
    %799 = vmatprep.subr.mxu0 0.0
    %800 = vmatpush2.xpose.msra.mxu0 0.0
    %801 = vmatprep.subr.mxu0 0.0
    %802 = vmatpush2.xpose.msra.mxu0 0.0
    %803 = vmatprep.subr.mxu0 0.0
    %804 = vmatpush2.xpose.msra.mxu0 0.0
    %805 = vmatprep.subr.mxu0 0.0
    %806 = vmatpush2.xpose.msra.mxu0 0.0
    %807 = vmatprep.mubr.f32.mxu0 0.0
    %808 = vmatmul.mubr.f32.gmra.mxu0 %v735
    %v809 = vpop.f32.mrf.mxu0
    %v810 = vadd.f32 0.0, %v809
    %v811 = vpop.f32.mrf.mxu0
    %812 = vmatprep.mubr.f32.mxu0 0.0
    %813 = vmatmul.mubr.f32.gmra.mxu0 %v737
    %v814 = vpop.f32.mrf.mxu0
    %v815 = vadd.f32 0.0, %v814
    %v816 = vpop.f32.mrf.mxu0
    %817 = vmatprep.mubr.f32.mxu0 0.0
    %818 = vmatmul.mubr.f32.gmra.mxu0 %v739
    %v819 = vpop.f32.mrf.mxu0
    %v820 = vadd.f32 0.0, %v819
    %v821 = vpop.f32.mrf.mxu0
    %822 = vdwg.mxu0
    %823 = vrot.lane.b32.xlu0 %v527, 32
    %v824 = vpop.permute.xlu0 %823
    %v825 = vsel %vm554, %v535, 0
    %v827 = vsel %vm554, %v539, 0
    %v829 = vsel %vm554, %v543, 0
    %v831 = vsel %vm554, %v824, 0
    %833 = vmatprep.subr.mxu0 0.0
    %834 = vmatpush1.xpose.msra.mxu0 0.0
    %835 = vmatprep.subr.mxu0 0.0
    %836 = vmatpush1.xpose.msra.mxu0 0.0
    %837 = vmatprep.subr.mxu0 0.0
    %838 = vmatpush1.xpose.msra.mxu0 0.0
    %839 = vmatprep.subr.mxu0 0.0
    %840 = vmatpush1.xpose.msra.mxu0 0.0
    %841 = vmatprep.subr.mxu0 0.0
    %842 = vmatpush1.xpose.msra.mxu0 0.0
    %843 = vmatprep.subr.mxu0 0.0
    %844 = vmatpush1.xpose.msra.mxu0 0.0
    %845 = vmatprep.subr.mxu0 0.0
    %846 = vmatpush1.xpose.msra.mxu0 0.0
    %847 = vmatprep.subr.mxu0 0.0
    %848 = vmatpush1.xpose.msra.mxu0 0.0
    %849 = vmatprep.subr.mxu0 0.0
    %850 = vmatpush1.xpose.msra.mxu0 0.0
    %851 = vmatprep.subr.mxu0 0.0
    %852 = vmatpush1.xpose.msra.mxu0 0.0
    %853 = vmatprep.subr.mxu0 0.0
    %854 = vmatpush1.xpose.msra.mxu0 0.0
    %855 = vmatprep.subr.mxu0 0.0
    %856 = vmatpush1.xpose.msra.mxu0 0.0
    %857 = vmatprep.subr.mxu0 0.0
    %858 = vmatpush1.xpose.msra.mxu0 0.0
    %859 = vmatprep.subr.mxu0 0.0
    %860 = vmatpush1.xpose.msra.mxu0 0.0
    %861 = vmatprep.subr.mxu0 0.0
    %862 = vmatpush1.xpose.msra.mxu0 0.0
    %863 = vmatprep.subr.mxu0 0.0
    %864 = vmatpush1.xpose.msra.mxu0 %v831
    %865 = vmatprep.subr.mxu0 0.0
    %866 = vmatpush2.xpose.msra.mxu0 0.0
    %867 = vmatprep.subr.mxu0 0.0
    %868 = vmatpush2.xpose.msra.mxu0 0.0
    %869 = vmatprep.subr.mxu0 0.0
    %870 = vmatpush2.xpose.msra.mxu0 0.0
    %871 = vmatprep.subr.mxu0 0.0
    %872 = vmatpush2.xpose.msra.mxu0 0.0
    %873 = vmatprep.subr.mxu0 0.0
    %874 = vmatpush2.xpose.msra.mxu0 0.0
    %875 = vmatprep.subr.mxu0 0.0
    %876 = vmatpush2.xpose.msra.mxu0 0.0
    %877 = vmatprep.subr.mxu0 0.0
    %878 = vmatpush2.xpose.msra.mxu0 0.0
    %879 = vmatprep.subr.mxu0 0.0
    %880 = vmatpush2.xpose.msra.mxu0 0.0
    %881 = vmatprep.subr.mxu0 0.0
    %882 = vmatpush2.xpose.msra.mxu0 0.0
    %883 = vmatprep.subr.mxu0 0.0
    %884 = vmatpush2.xpose.msra.mxu0 0.0
    %885 = vmatprep.subr.mxu0 0.0
    %886 = vmatpush2.xpose.msra.mxu0 0.0
    %887 = vmatprep.subr.mxu0 0.0
    %888 = vmatpush2.xpose.msra.mxu0 0.0
    %889 = vmatprep.subr.mxu0 0.0
    %890 = vmatpush2.xpose.msra.mxu0 0.0
    %891 = vmatprep.subr.mxu0 0.0
    %892 = vmatpush2.xpose.msra.mxu0 0.0
    %893 = vmatprep.subr.mxu0 0.0
    %894 = vmatpush2.xpose.msra.mxu0 0.0
    %895 = vmatprep.subr.mxu0 0.0
    %896 = vmatpush2.xpose.msra.mxu0 0.0
    %897 = vmatprep.mubr.f32.mxu0 0.0
    %898 = vmatmul.mubr.f32.gmra.mxu0 %v825
    %v899 = vpop.f32.mrf.mxu0
    %v900 = vadd.f32 0.0, %v899
    %v901 = vpop.f32.mrf.mxu0
    %902 = vmatprep.mubr.f32.mxu0 0.0
    %903 = vmatmul.mubr.f32.gmra.mxu0 %v827
    %v904 = vpop.f32.mrf.mxu0
    %v905 = vadd.f32 0.0, %v904
    %v906 = vpop.f32.mrf.mxu0
    %907 = vmatprep.mubr.f32.mxu0 0.0
    %908 = vmatmul.mubr.f32.gmra.mxu0 %v829
    %v909 = vpop.f32.mrf.mxu0
    %v910 = vadd.f32 0.0, %v909
    %v911 = vpop.f32.mrf.mxu0
    %912 = vdwg.mxu0
    %v913 = vmul.f32 %v630, 0.25
    %v914 = vmul.f32 %v635, 0.25
    %v915 = vmul.f32 %v640, 0.25
    %v916 = vmul.f32 %v720, 0.25
    %v917 = vmul.f32 %v725, 0.25
    %v918 = vmul.f32 %v730, 0.25
    %v919 = vmul.f32 %v810, 0.25
    %v920 = vmul.f32 %v815, 0.25
    %v921 = vmul.f32 %v820, 0.25
    %v922 = vmul.f32 %v900, 0.25
    %v923 = vmul.f32 %v905, 0.25
    %v924 = vmul.f32 %v910, 0.25
    %v925 = vlaneseq
    %v926 = vshrl.u32 %v925, 7
    %v927 = vlaneseq
    %v928 = vand.u32 %v927, 127
    %vm929 = vcmp.ge.s32.totalorder %v926, %v928
    %v930 = vsel %vm929, 1, 0
    %vm931 = vcmp.eq.s32.totalorder %v930, 1
    %v932 = vsel %vm931, %v913, -1e+30
    %v933 = vsel %vm931, %v914, -1e+30
    %v934 = vsel %vm931, %v915, -1e+30
    %v935 = vsel %vm931, %v916, -1e+30
    %v936 = vsel %vm931, %v917, -1e+30
    %v937 = vsel %vm931, %v918, -1e+30
    %v938 = vsel %vm931, %v919, -1e+30
    %v939 = vsel %vm931, %v920, -1e+30
    %v940 = vsel %vm931, %v921, -1e+30
    %v941 = vsel %vm931, %v922, -1e+30
    %v942 = vsel %vm931, %v923, -1e+30
    %v943 = vsel %vm931, %v924, -1e+30
    %vm944 = vcmask 64512
    %v945 = vsel %vm944, %v932, -inf
    %946 = vmax.xlane.f32.xlu0 %v945
    %v947 = vpop.xlane.xlu0 %946
    %v948 = vsel %vm944, %v933, -inf
    %949 = vmax.xlane.f32.xlu0 %v948
    %v950 = vpop.xlane.xlu0 %949
    %v951 = vsel %vm944, %v934, -inf
    %952 = vmax.xlane.f32.xlu0 %v951
    %v953 = vpop.xlane.xlu0 %952
    %v954 = vsel %vm944, %v935, -inf
    %955 = vmax.xlane.f32.xlu0 %v954
    %v956 = vpop.xlane.xlu0 %955
    %v957 = vsel %vm944, %v936, -inf
    %958 = vmax.xlane.f32.xlu0 %v957
    %v959 = vpop.xlane.xlu0 %958
    %v960 = vsel %vm944, %v937, -inf
    %961 = vmax.xlane.f32.xlu0 %v960
    %v962 = vpop.xlane.xlu0 %961
    %v963 = vsel %vm944, %v938, -inf
    %964 = vmax.xlane.f32.xlu0 %v963
    %v965 = vpop.xlane.xlu0 %964
    %v966 = vsel %vm944, %v939, -inf
    %967 = vmax.xlane.f32.xlu0 %v966
    %v968 = vpop.xlane.xlu0 %967
    %v969 = vsel %vm944, %v940, -inf
    %970 = vmax.xlane.f32.xlu0 %v969
    %v971 = vpop.xlane.xlu0 %970
    %v972 = vsel %vm944, %v941, -inf
    %973 = vmax.xlane.f32.xlu0 %v972
    %v974 = vpop.xlane.xlu0 %973
    %v975 = vsel %vm944, %v942, -inf
    %976 = vmax.xlane.f32.xlu0 %v975
    %v977 = vpop.xlane.xlu0 %976
    %v978 = vsel %vm944, %v943, -inf
    %979 = vmax.xlane.f32.xlu0 %v978
    %v980 = vpop.xlane.xlu0 %979
    %v981 = vsub.f32 %v932, %v947
    %v982 = vsub.f32 %v933, %v950
    %v983 = vsub.f32 %v934, %v953
    %v984 = vsub.f32 %v935, %v956
    %v985 = vsub.f32 %v936, %v959
    %v986 = vsub.f32 %v937, %v962
    %v987 = vsub.f32 %v938, %v965
    %v988 = vsub.f32 %v939, %v968
    %v989 = vsub.f32 %v940, %v971
    %v990 = vsub.f32 %v941, %v974
    %v991 = vsub.f32 %v942, %v977
    %v992 = vsub.f32 %v943, %v980
    %v993 = vmul.f32 %v981, 1.442695
    %v994 = vpow.pop %v993
    %v995 = vmul.f32 %v982, 1.442695
    %v996 = vpow.pop %v995
    %v997 = vmul.f32 %v983, 1.442695
    %v998 = vpow.pop %v997
    %v999 = vmul.f32 %v984, 1.442695
    %v1000 = vpow.pop %v999
    %v1001 = vmul.f32 %v985, 1.442695
    %v1002 = vpow.pop %v1001
    %v1003 = vmul.f32 %v986, 1.442695
    %v1004 = vpow.pop %v1003
    %v1005 = vmul.f32 %v987, 1.442695
    %v1006 = vpow.pop %v1005
    %v1007 = vmul.f32 %v988, 1.442695
    %v1008 = vpow.pop %v1007
    %v1009 = vmul.f32 %v989, 1.442695
    %v1010 = vpow.pop %v1009
    %v1011 = vmul.f32 %v990, 1.442695
    %v1012 = vpow.pop %v1011
    %v1013 = vmul.f32 %v991, 1.442695
    %v1014 = vpow.pop %v1013
    %v1015 = vmul.f32 %v992, 1.442695
    %v1016 = vpow.pop %v1015
    %v1017 = vsel %vm944, %v994, 0.0
    %1018 = vadd.xlane.f32.xlu0 %v1017
    %v1019 = vpop.xlane.xlu0 %1018
    %v1020 = vsel %vm944, %v996, 0.0
    %1021 = vadd.xlane.f32.xlu0 %v1020
    %v1022 = vpop.xlane.xlu0 %1021
    %v1023 = vsel %vm944, %v998, 0.0
    %1024 = vadd.xlane.f32.xlu0 %v1023
    %v1025 = vpop.xlane.xlu0 %1024
    %v1026 = vsel %vm944, %v1000, 0.0
    %1027 = vadd.xlane.f32.xlu0 %v1026
    %v1028 = vpop.xlane.xlu0 %1027
    %v1029 = vsel %vm944, %v1002, 0.0
    %1030 = vadd.xlane.f32.xlu0 %v1029
    %v1031 = vpop.xlane.xlu0 %1030
    %v1032 = vsel %vm944, %v1004, 0.0
    %1033 = vadd.xlane.f32.xlu0 %v1032
    %v1034 = vpop.xlane.xlu0 %1033
    %v1035 = vsel %vm944, %v1006, 0.0
    %1036 = vadd.xlane.f32.xlu0 %v1035
    %v1037 = vpop.xlane.xlu0 %1036
    %v1038 = vsel %vm944, %v1008, 0.0
    %1039 = vadd.xlane.f32.xlu0 %v1038
    %v1040 = vpop.xlane.xlu0 %1039
    %v1041 = vsel %vm944, %v1010, 0.0
    %1042 = vadd.xlane.f32.xlu0 %v1041
    %v1043 = vpop.xlane.xlu0 %1042
    %v1044 = vsel %vm944, %v1012, 0.0
    %1045 = vadd.xlane.f32.xlu0 %v1044
    %v1046 = vpop.xlane.xlu0 %1045
    %v1047 = vsel %vm944, %v1014, 0.0
    %1048 = vadd.xlane.f32.xlu0 %v1047
    %v1049 = vpop.xlane.xlu0 %1048
    %v1050 = vsel %vm944, %v1016, 0.0
    %1051 = vadd.xlane.f32.xlu0 %v1050
    %v1052 = vpop.xlane.xlu0 %1051
    %v1053 = vrcp.pop %v1019
    %v1054 = vrcp.pop %v1022
    %v1055 = vrcp.pop %v1025
    %v1056 = vrcp.pop %v1028
    %v1057 = vrcp.pop %v1031
    %v1058 = vrcp.pop %v1034
    %v1059 = vrcp.pop %v1037
    %v1060 = vrcp.pop %v1040
    %v1061 = vrcp.pop %v1043
    %v1062 = vrcp.pop %v1046
    %v1063 = vrcp.pop %v1049
    %v1064 = vrcp.pop %v1052
    %v1065 = vmul.f32 %v994, %v1053
    %v1066 = vmul.f32 %v996, %v1054
    %v1067 = vmul.f32 %v998, %v1055
    %v1068 = vmul.f32 %v1000, %v1056
    %v1069 = vmul.f32 %v1002, %v1057
    %v1070 = vmul.f32 %v1004, %v1058
    %v1071 = vmul.f32 %v1006, %v1059
    %v1072 = vmul.f32 %v1008, %v1060
    %v1073 = vmul.f32 %v1010, %v1061
    %v1074 = vmul.f32 %v1012, %v1062
    %v1075 = vmul.f32 %v1014, %v1063
    %v1076 = vmul.f32 %v1016, %v1064
    %v1078 = vsel %vm944, %v1065, 0
    %v1081 = vsel %vm944, %v1066, 0
    %v1084 = vsel %vm944, %v1067, 0
    %1086 = vmatprep.subr.mxu0 0.0
    %1087 = vmatpush1.msra.mxu0 0.0
    %1088 = vmatprep.subr.mxu0 0.0
    %1089 = vmatpush1.msra.mxu0 0.0
    %1090 = vmatprep.subr.mxu0 0.0
    %1091 = vmatpush1.msra.mxu0 0.0
    %1092 = vmatprep.subr.mxu0 0.0
    %1093 = vmatpush1.msra.mxu0 0.0
    %1094 = vmatprep.subr.mxu0 0.0
    %1095 = vmatpush1.msra.mxu0 0.0
    %1096 = vmatprep.subr.mxu0 0.0
    %1097 = vmatpush1.msra.mxu0 0.0
    %1098 = vmatprep.subr.mxu0 0.0
    %1099 = vmatpush1.msra.mxu0 0.0
    %1100 = vmatprep.subr.mxu0 0.0
    %1101 = vmatpush1.msra.mxu0 0.0
    %1102 = vmatprep.subr.mxu0 0.0
    %1103 = vmatpush1.msra.mxu0 0.0
    %1104 = vmatprep.subr.mxu0 0.0
    %1105 = vmatpush1.msra.mxu0 0.0
    %1106 = vmatprep.subr.mxu0 0.0
    %1107 = vmatpush1.msra.mxu0 0.0
    %1108 = vmatprep.subr.mxu0 0.0
    %1109 = vmatpush1.msra.mxu0 0.0
    %1110 = vmatprep.subr.mxu0 0.0
    %1111 = vmatpush1.msra.mxu0 0.0
    %1112 = vmatprep.subr.mxu0 0.0
    %1113 = vmatpush1.msra.mxu0 0.0
    %1114 = vmatprep.subr.mxu0 0.0
    %1115 = vmatpush1.msra.mxu0 0.0
    %1116 = vmatprep.subr.mxu0 0.0
    %1117 = vmatpush1.msra.mxu0 %v506
    %1118 = vmatprep.subr.mxu0 0.0
    %1119 = vmatpush2.msra.mxu0 0.0
    %1120 = vmatprep.subr.mxu0 0.0
    %1121 = vmatpush2.msra.mxu0 0.0
    %1122 = vmatprep.subr.mxu0 0.0
    %1123 = vmatpush2.msra.mxu0 0.0
    %1124 = vmatprep.subr.mxu0 0.0
    %1125 = vmatpush2.msra.mxu0 0.0
    %1126 = vmatprep.subr.mxu0 0.0
    %1127 = vmatpush2.msra.mxu0 0.0
    %1128 = vmatprep.subr.mxu0 0.0
    %1129 = vmatpush2.msra.mxu0 0.0
    %1130 = vmatprep.subr.mxu0 0.0
    %1131 = vmatpush2.msra.mxu0 0.0
    %1132 = vmatprep.subr.mxu0 0.0
    %1133 = vmatpush2.msra.mxu0 0.0
    %1134 = vmatprep.subr.mxu0 0.0
    %1135 = vmatpush2.msra.mxu0 0.0
    %1136 = vmatprep.subr.mxu0 0.0
    %1137 = vmatpush2.msra.mxu0 0.0
    %1138 = vmatprep.subr.mxu0 0.0
    %1139 = vmatpush2.msra.mxu0 0.0
    %1140 = vmatprep.subr.mxu0 0.0
    %1141 = vmatpush2.msra.mxu0 0.0
    %1142 = vmatprep.subr.mxu0 0.0
    %1143 = vmatpush2.msra.mxu0 0.0
    %1144 = vmatprep.subr.mxu0 0.0
    %1145 = vmatpush2.msra.mxu0 0.0
    %1146 = vmatprep.subr.mxu0 0.0
    %1147 = vmatpush2.msra.mxu0 0.0
    %1148 = vmatprep.subr.mxu0 0.0
    %1149 = vmatpush2.msra.mxu0 0.0
    %1150 = vmatprep.mubr.f32.mxu0 0.0
    %1151 = vmatmul.mubr.f32.gmra.mxu0 %v1078
    %v1152 = vpop.f32.mrf.mxu0
    %v1153 = vadd.f32 0.0, %v1152
    %v1154 = vpop.f32.mrf.mxu0
    %1155 = vmatprep.mubr.f32.mxu0 0.0
    %1156 = vmatmul.mubr.f32.gmra.mxu0 %v1081
    %v1157 = vpop.f32.mrf.mxu0
    %v1158 = vadd.f32 0.0, %v1157
    %v1159 = vpop.f32.mrf.mxu0
    %1160 = vmatprep.mubr.f32.mxu0 0.0
    %1161 = vmatmul.mubr.f32.gmra.mxu0 %v1084
    %v1162 = vpop.f32.mrf.mxu0
    %v1163 = vadd.f32 0.0, %v1162
    %v1164 = vpop.f32.mrf.mxu0
    %1165 = vdwg.mxu0
    %v1167 = vsel %vm944, %v1068, 0
    %v1170 = vsel %vm944, %v1069, 0
    %v1173 = vsel %vm944, %v1070, 0
    %1175 = vmatprep.subr.mxu0 0.0
    %1176 = vmatpush1.msra.mxu0 0.0
    %1177 = vmatprep.subr.mxu0 0.0
    %1178 = vmatpush1.msra.mxu0 0.0
    %1179 = vmatprep.subr.mxu0 0.0
    %1180 = vmatpush1.msra.mxu0 0.0
    %1181 = vmatprep.subr.mxu0 0.0
    %1182 = vmatpush1.msra.mxu0 0.0
    %1183 = vmatprep.subr.mxu0 0.0
    %1184 = vmatpush1.msra.mxu0 0.0
    %1185 = vmatprep.subr.mxu0 0.0
    %1186 = vmatpush1.msra.mxu0 0.0
    %1187 = vmatprep.subr.mxu0 0.0
    %1188 = vmatpush1.msra.mxu0 0.0
    %1189 = vmatprep.subr.mxu0 0.0
    %1190 = vmatpush1.msra.mxu0 0.0
    %1191 = vmatprep.subr.mxu0 0.0
    %1192 = vmatpush1.msra.mxu0 0.0
    %1193 = vmatprep.subr.mxu0 0.0
    %1194 = vmatpush1.msra.mxu0 0.0
    %1195 = vmatprep.subr.mxu0 0.0
    %1196 = vmatpush1.msra.mxu0 0.0
    %1197 = vmatprep.subr.mxu0 0.0
    %1198 = vmatpush1.msra.mxu0 0.0
    %1199 = vmatprep.subr.mxu0 0.0
    %1200 = vmatpush1.msra.mxu0 0.0
    %1201 = vmatprep.subr.mxu0 0.0
    %1202 = vmatpush1.msra.mxu0 0.0
    %1203 = vmatprep.subr.mxu0 0.0
    %1204 = vmatpush1.msra.mxu0 0.0
    %1205 = vmatprep.subr.mxu0 0.0
    %1206 = vmatpush1.msra.mxu0 %v547
    %1207 = vmatprep.subr.mxu0 0.0
    %1208 = vmatpush2.msra.mxu0 0.0
    %1209 = vmatprep.subr.mxu0 0.0
    %1210 = vmatpush2.msra.mxu0 0.0
    %1211 = vmatprep.subr.mxu0 0.0
    %1212 = vmatpush2.msra.mxu0 0.0
    %1213 = vmatprep.subr.mxu0 0.0
    %1214 = vmatpush2.msra.mxu0 0.0
    %1215 = vmatprep.subr.mxu0 0.0
    %1216 = vmatpush2.msra.mxu0 0.0
    %1217 = vmatprep.subr.mxu0 0.0
    %1218 = vmatpush2.msra.mxu0 0.0
    %1219 = vmatprep.subr.mxu0 0.0
    %1220 = vmatpush2.msra.mxu0 0.0
    %1221 = vmatprep.subr.mxu0 0.0
    %1222 = vmatpush2.msra.mxu0 0.0
    %1223 = vmatprep.subr.mxu0 0.0
    %1224 = vmatpush2.msra.mxu0 0.0
    %1225 = vmatprep.subr.mxu0 0.0
    %1226 = vmatpush2.msra.mxu0 0.0
    %1227 = vmatprep.subr.mxu0 0.0
    %1228 = vmatpush2.msra.mxu0 0.0
    %1229 = vmatprep.subr.mxu0 0.0
    %1230 = vmatpush2.msra.mxu0 0.0
    %1231 = vmatprep.subr.mxu0 0.0
    %1232 = vmatpush2.msra.mxu0 0.0
    %1233 = vmatprep.subr.mxu0 0.0
    %1234 = vmatpush2.msra.mxu0 0.0
    %1235 = vmatprep.subr.mxu0 0.0
    %1236 = vmatpush2.msra.mxu0 0.0
    %1237 = vmatprep.subr.mxu0 0.0
    %1238 = vmatpush2.msra.mxu0 0.0
    %1239 = vmatprep.mubr.f32.mxu0 0.0
    %1240 = vmatmul.mubr.f32.gmra.mxu0 %v1167
    %v1241 = vpop.f32.mrf.mxu0
    %v1242 = vadd.f32 0.0, %v1241
    %v1243 = vpop.f32.mrf.mxu0
    %1244 = vmatprep.mubr.f32.mxu0 0.0
    %1245 = vmatmul.mubr.f32.gmra.mxu0 %v1170
    %v1246 = vpop.f32.mrf.mxu0
    %v1247 = vadd.f32 0.0, %v1246
    %v1248 = vpop.f32.mrf.mxu0
    %1249 = vmatprep.mubr.f32.mxu0 0.0
    %1250 = vmatmul.mubr.f32.gmra.mxu0 %v1173
    %v1251 = vpop.f32.mrf.mxu0
    %v1252 = vadd.f32 0.0, %v1251
    %v1253 = vpop.f32.mrf.mxu0
    %1254 = vdwg.mxu0
    %v1256 = vsel %vm944, %v1071, 0
    %v1259 = vsel %vm944, %v1072, 0
    %v1262 = vsel %vm944, %v1073, 0
    %1264 = vmatprep.subr.mxu0 0.0
    %1265 = vmatpush1.msra.mxu0 0.0
    %1266 = vmatprep.subr.mxu0 0.0
    %1267 = vmatpush1.msra.mxu0 0.0
    %1268 = vmatprep.subr.mxu0 0.0
    %1269 = vmatpush1.msra.mxu0 0.0
    %1270 = vmatprep.subr.mxu0 0.0
    %1271 = vmatpush1.msra.mxu0 0.0
    %1272 = vmatprep.subr.mxu0 0.0
    %1273 = vmatpush1.msra.mxu0 0.0
    %1274 = vmatprep.subr.mxu0 0.0
    %1275 = vmatpush1.msra.mxu0 0.0
    %1276 = vmatprep.subr.mxu0 0.0
    %1277 = vmatpush1.msra.mxu0 0.0
    %1278 = vmatprep.subr.mxu0 0.0
    %1279 = vmatpush1.msra.mxu0 0.0
    %1280 = vmatprep.subr.mxu0 0.0
    %1281 = vmatpush1.msra.mxu0 0.0
    %1282 = vmatprep.subr.mxu0 0.0
    %1283 = vmatpush1.msra.mxu0 0.0
    %1284 = vmatprep.subr.mxu0 0.0
    %1285 = vmatpush1.msra.mxu0 0.0
    %1286 = vmatprep.subr.mxu0 0.0
    %1287 = vmatpush1.msra.mxu0 0.0
    %1288 = vmatprep.subr.mxu0 0.0
    %1289 = vmatpush1.msra.mxu0 0.0
    %1290 = vmatprep.subr.mxu0 0.0
    %1291 = vmatpush1.msra.mxu0 0.0
    %1292 = vmatprep.subr.mxu0 0.0
    %1293 = vmatpush1.msra.mxu0 0.0
    %1294 = vmatprep.subr.mxu0 0.0
    %1295 = vmatpush1.msra.mxu0 %v511
    %1296 = vmatprep.subr.mxu0 0.0
    %1297 = vmatpush2.msra.mxu0 0.0
    %1298 = vmatprep.subr.mxu0 0.0
    %1299 = vmatpush2.msra.mxu0 0.0
    %1300 = vmatprep.subr.mxu0 0.0
    %1301 = vmatpush2.msra.mxu0 0.0
    %1302 = vmatprep.subr.mxu0 0.0
    %1303 = vmatpush2.msra.mxu0 0.0
    %1304 = vmatprep.subr.mxu0 0.0
    %1305 = vmatpush2.msra.mxu0 0.0
    %1306 = vmatprep.subr.mxu0 0.0
    %1307 = vmatpush2.msra.mxu0 0.0
    %1308 = vmatprep.subr.mxu0 0.0
    %1309 = vmatpush2.msra.mxu0 0.0
    %1310 = vmatprep.subr.mxu0 0.0
    %1311 = vmatpush2.msra.mxu0 0.0
    %1312 = vmatprep.subr.mxu0 0.0
    %1313 = vmatpush2.msra.mxu0 0.0
    %1314 = vmatprep.subr.mxu0 0.0
    %1315 = vmatpush2.msra.mxu0 0.0
    %1316 = vmatprep.subr.mxu0 0.0
    %1317 = vmatpush2.msra.mxu0 0.0
    %1318 = vmatprep.subr.mxu0 0.0
    %1319 = vmatpush2.msra.mxu0 0.0
    %1320 = vmatprep.subr.mxu0 0.0
    %1321 = vmatpush2.msra.mxu0 0.0
    %1322 = vmatprep.subr.mxu0 0.0
    %1323 = vmatpush2.msra.mxu0 0.0
    %1324 = vmatprep.subr.mxu0 0.0
    %1325 = vmatpush2.msra.mxu0 0.0
    %1326 = vmatprep.subr.mxu0 0.0
    %1327 = vmatpush2.msra.mxu0 0.0
    %1328 = vmatprep.mubr.f32.mxu0 0.0
    %1329 = vmatmul.mubr.f32.gmra.mxu0 %v1256
    %v1330 = vpop.f32.mrf.mxu0
    %v1331 = vadd.f32 0.0, %v1330
    %v1332 = vpop.f32.mrf.mxu0
    %1333 = vmatprep.mubr.f32.mxu0 0.0
    %1334 = vmatmul.mubr.f32.gmra.mxu0 %v1259
    %v1335 = vpop.f32.mrf.mxu0
    %v1336 = vadd.f32 0.0, %v1335
    %v1337 = vpop.f32.mrf.mxu0
    %1338 = vmatprep.mubr.f32.mxu0 0.0
    %1339 = vmatmul.mubr.f32.gmra.mxu0 %v1262
    %v1340 = vpop.f32.mrf.mxu0
    %v1341 = vadd.f32 0.0, %v1340
    %v1342 = vpop.f32.mrf.mxu0
    %1343 = vdwg.mxu0
    %v1345 = vsel %vm944, %v1074, 0
    %v1348 = vsel %vm944, %v1075, 0
    %v1351 = vsel %vm944, %v1076, 0
    %1353 = vmatprep.subr.mxu0 0.0
    %1354 = vmatpush1.msra.mxu0 0.0
    %1355 = vmatprep.subr.mxu0 0.0
    %1356 = vmatpush1.msra.mxu0 0.0
    %1357 = vmatprep.subr.mxu0 0.0
    %1358 = vmatpush1.msra.mxu0 0.0
    %1359 = vmatprep.subr.mxu0 0.0
    %1360 = vmatpush1.msra.mxu0 0.0
    %1361 = vmatprep.subr.mxu0 0.0
    %1362 = vmatpush1.msra.mxu0 0.0
    %1363 = vmatprep.subr.mxu0 0.0
    %1364 = vmatpush1.msra.mxu0 0.0
    %1365 = vmatprep.subr.mxu0 0.0
    %1366 = vmatpush1.msra.mxu0 0.0
    %1367 = vmatprep.subr.mxu0 0.0
    %1368 = vmatpush1.msra.mxu0 0.0
    %1369 = vmatprep.subr.mxu0 0.0
    %1370 = vmatpush1.msra.mxu0 0.0
    %1371 = vmatprep.subr.mxu0 0.0
    %1372 = vmatpush1.msra.mxu0 0.0
    %1373 = vmatprep.subr.mxu0 0.0
    %1374 = vmatpush1.msra.mxu0 0.0
    %1375 = vmatprep.subr.mxu0 0.0
    %1376 = vmatpush1.msra.mxu0 0.0
    %1377 = vmatprep.subr.mxu0 0.0
    %1378 = vmatpush1.msra.mxu0 0.0
    %1379 = vmatprep.subr.mxu0 0.0
    %1380 = vmatpush1.msra.mxu0 0.0
    %1381 = vmatprep.subr.mxu0 0.0
    %1382 = vmatpush1.msra.mxu0 0.0
    %1383 = vmatprep.subr.mxu0 0.0
    %1384 = vmatpush1.msra.mxu0 %v549
    %1385 = vmatprep.subr.mxu0 0.0
    %1386 = vmatpush2.msra.mxu0 0.0
    %1387 = vmatprep.subr.mxu0 0.0
    %1388 = vmatpush2.msra.mxu0 0.0
    %1389 = vmatprep.subr.mxu0 0.0
    %1390 = vmatpush2.msra.mxu0 0.0
    %1391 = vmatprep.subr.mxu0 0.0
    %1392 = vmatpush2.msra.mxu0 0.0
    %1393 = vmatprep.subr.mxu0 0.0
    %1394 = vmatpush2.msra.mxu0 0.0
    %1395 = vmatprep.subr.mxu0 0.0
    %1396 = vmatpush2.msra.mxu0 0.0
    %1397 = vmatprep.subr.mxu0 0.0
    %1398 = vmatpush2.msra.mxu0 0.0
    %1399 = vmatprep.subr.mxu0 0.0
    %1400 = vmatpush2.msra.mxu0 0.0
    %1401 = vmatprep.subr.mxu0 0.0
    %1402 = vmatpush2.msra.mxu0 0.0
    %1403 = vmatprep.subr.mxu0 0.0
    %1404 = vmatpush2.msra.mxu0 0.0
    %1405 = vmatprep.subr.mxu0 0.0
    %1406 = vmatpush2.msra.mxu0 0.0
    %1407 = vmatprep.subr.mxu0 0.0
    %1408 = vmatpush2.msra.mxu0 0.0
    %1409 = vmatprep.subr.mxu0 0.0
    %1410 = vmatpush2.msra.mxu0 0.0
    %1411 = vmatprep.subr.mxu0 0.0
    %1412 = vmatpush2.msra.mxu0 0.0
    %1413 = vmatprep.subr.mxu0 0.0
    %1414 = vmatpush2.msra.mxu0 0.0
    %1415 = vmatprep.subr.mxu0 0.0
    %1416 = vmatpush2.msra.mxu0 0.0
    %1417 = vmatprep.mubr.f32.mxu0 0.0
    %1418 = vmatmul.mubr.f32.gmra.mxu0 %v1345
    %v1419 = vpop.f32.mrf.mxu0
    %v1420 = vadd.f32 0.0, %v1419
    %v1421 = vpop.f32.mrf.mxu0
    %1422 = vmatprep.mubr.f32.mxu0 0.0
    %1423 = vmatmul.mubr.f32.gmra.mxu0 %v1348
    %v1424 = vpop.f32.mrf.mxu0
    %v1425 = vadd.f32 0.0, %v1424
    %v1426 = vpop.f32.mrf.mxu0
    %1427 = vmatprep.mubr.f32.mxu0 0.0
    %1428 = vmatmul.mubr.f32.gmra.mxu0 %v1351
    %v1429 = vpop.f32.mrf.mxu0
    %v1430 = vadd.f32 0.0, %v1429
    %v1431 = vpop.f32.mrf.mxu0
    %1432 = vdwg.mxu0
    %1435 = vrot.lane.b32.xlu0 %v1158, 16
    %v1436 = vpop.permute.xlu0 %1435
    %1437 = vrot.lane.b32.xlu0 %v1336, 16
    %v1438 = vpop.permute.xlu0 %1437
    %1443 = vrot.lane.b32.xlu0 %v1163, 32
    %v1444 = vpop.permute.xlu0 %1443
    %1445 = vrot.lane.b32.xlu0 %v1341, 32
    %v1446 = vpop.permute.xlu0 %1445
    %1451 = vrot.lane.b32.xlu0 %v1242, 48
    %v1452 = vpop.permute.xlu0 %1451
    %1453 = vrot.lane.b32.xlu0 %v1420, 48
    %v1454 = vpop.permute.xlu0 %1453
    %1459 = vrot.lane.b32.xlu0 %v1247, 64
    %v1460 = vpop.permute.xlu0 %1459
    %1461 = vrot.lane.b32.xlu0 %v1425, 64
    %v1462 = vpop.permute.xlu0 %1461
    %1467 = vrot.lane.b32.xlu0 %v1252, 80
    %v1468 = vpop.permute.xlu0 %1467
    %1469 = vrot.lane.b32.xlu0 %v1430, 80
    %v1470 = vpop.permute.xlu0 %1469
    %v1473 = vsel %vm554, %v1153, %v1436
    %v1474 = vsel %vm554, %v1331, %v1438
    %vm1475 = vcmask 261120
    %v1476 = vsel %vm1475, %v1473, %v1444
    %v1477 = vsel %vm1475, %v1474, %v1446
    %vm1478 = vcmask 392192
    %v1479 = vsel %vm1478, %v1476, %v1452
    %v1480 = vsel %vm1478, %v1477, %v1454
    %vm1481 = vcmask 523264
    %v1482 = vsel %vm1481, %v1479, %v1460
    %v1483 = vsel %vm1481, %v1480, %v1462
    %vm1484 = vcmask 654336
    %v1485 = vsel %vm1484, %v1482, %v1468
    %v1486 = vsel %vm1484, %v1483, %v1470
    %v1487 = vld [vmem:[#allocation8] sm:$0xff]
    %v1488 = vld [vmem:[#allocation8 + $0x8] sm:$0xff]
    %v1489 = vld [vmem:[#allocation8 + $0x10] sm:$0xff]
    %v1490 = vld [vmem:[#allocation8 + $0x18] sm:$0xff]
    %v1491 = vld [vmem:[#allocation8 + $0x20] sm:$0xff]
    %v1492 = vld [vmem:[#allocation8 + $0x28] sm:$0xff]
    %v1493 = vld [vmem:[#allocation8 + $0x30] sm:$0xff]
    %v1494 = vld [vmem:[#allocation8 + $0x38] sm:$0xff]
    %v1495 = vld [vmem:[#allocation8 + $0x40] sm:$0xff]
    %v1496 = vld [vmem:[#allocation8 + $0x48] sm:$0xff]
    %v1497 = vld [vmem:[#allocation8 + $0x50] sm:$0xff]
    %v1498 = vld [vmem:[#allocation8 + $0x58] sm:$0xff]
    %v1500 = vsel %vm299, %v1485, 0
    %v1503 = vsel %vm299, %v1486, 0
    %1505 = vmatprep.subr.mxu0 0.0
    %1506 = vmatpush1.msra.mxu0 0.0
    %1507 = vmatprep.subr.mxu0 0.0
    %1508 = vmatpush1.msra.mxu0 0.0
    %1509 = vmatprep.subr.mxu0 0.0
    %1510 = vmatpush1.msra.mxu0 0.0
    %1511 = vmatprep.subr.mxu0 0.0
    %1512 = vmatpush1.msra.mxu0 0.0
    %1513 = vmatprep.subr.mxu0 0.0
    %1514 = vmatpush1.msra.mxu0 %v1498
    %1515 = vmatprep.subr.mxu0 0.0
    %1516 = vmatpush1.msra.mxu0 %v1497
    %1517 = vmatprep.subr.mxu0 0.0
    %1518 = vmatpush1.msra.mxu0 %v1496
    %1519 = vmatprep.subr.mxu0 0.0
    %1520 = vmatpush1.msra.mxu0 %v1495
    %1521 = vmatprep.subr.mxu0 0.0
    %1522 = vmatpush1.msra.mxu0 %v1494
    %1523 = vmatprep.subr.mxu0 0.0
    %1524 = vmatpush1.msra.mxu0 %v1493
    %1525 = vmatprep.subr.mxu0 0.0
    %1526 = vmatpush1.msra.mxu0 %v1492
    %1527 = vmatprep.subr.mxu0 0.0
    %1528 = vmatpush1.msra.mxu0 %v1491
    %1529 = vmatprep.subr.mxu0 0.0
    %1530 = vmatpush1.msra.mxu0 %v1490
    %1531 = vmatprep.subr.mxu0 0.0
    %1532 = vmatpush1.msra.mxu0 %v1489
    %1533 = vmatprep.subr.mxu0 0.0
    %1534 = vmatpush1.msra.mxu0 %v1488
    %1535 = vmatprep.subr.mxu0 0.0
    %1536 = vmatpush1.msra.mxu0 %v1487
    %1537 = vmatprep.subr.mxu0 0.0
    %1538 = vmatpush2.msra.mxu0 0.0
    %1539 = vmatprep.subr.mxu0 0.0
    %1540 = vmatpush2.msra.mxu0 0.0
    %1541 = vmatprep.subr.mxu0 0.0
    %1542 = vmatpush2.msra.mxu0 0.0
    %1543 = vmatprep.subr.mxu0 0.0
    %1544 = vmatpush2.msra.mxu0 0.0
    %1545 = vmatprep.subr.mxu0 0.0
    %1546 = vmatpush2.msra.mxu0 0.0
    %1547 = vmatprep.subr.mxu0 0.0
    %1548 = vmatpush2.msra.mxu0 0.0
    %1549 = vmatprep.subr.mxu0 0.0
    %1550 = vmatpush2.msra.mxu0 0.0
    %1551 = vmatprep.subr.mxu0 0.0
    %1552 = vmatpush2.msra.mxu0 0.0
    %1553 = vmatprep.subr.mxu0 0.0
    %1554 = vmatpush2.msra.mxu0 0.0
    %1555 = vmatprep.subr.mxu0 0.0
    %1556 = vmatpush2.msra.mxu0 0.0
    %1557 = vmatprep.subr.mxu0 0.0
    %1558 = vmatpush2.msra.mxu0 0.0
    %1559 = vmatprep.subr.mxu0 0.0
    %1560 = vmatpush2.msra.mxu0 0.0
    %1561 = vmatprep.subr.mxu0 0.0
    %1562 = vmatpush2.msra.mxu0 0.0
    %1563 = vmatprep.subr.mxu0 0.0
    %1564 = vmatpush2.msra.mxu0 0.0
    %1565 = vmatprep.subr.mxu0 0.0
    %1566 = vmatpush2.msra.mxu0 0.0
    %1567 = vmatprep.subr.mxu0 0.0
    %1568 = vmatpush2.msra.mxu0 0.0
    %1569 = vmatprep.mubr.f32.mxu0 0.0
    %1570 = vmatmul.mubr.f32.gmra.mxu0 %v1500
    %v1571 = vpop.f32.mrf.mxu0
    %v1572 = vadd.f32 0.0, %v1571
    %v1573 = vpop.f32.mrf.mxu0
    %1574 = vmatprep.mubr.f32.mxu0 0.0
    %1575 = vmatmul.mubr.f32.gmra.mxu0 %v1503
    %v1576 = vpop.f32.mrf.mxu0
    %v1577 = vadd.f32 0.0, %v1576
    %v1578 = vpop.f32.mrf.mxu0
    %1579 = vdwg.mxu0
    %v1580 = vadd.f32 %v294, %v1572
    %v1581 = vadd.f32 %v295, %v1577
    %v1582 = vmul.f32 %v1580, %v1580
    %v1583 = vmul.f32 %v1581, %v1581
    %v1584 = vsel %vm299, %v1582, 0.0
    %1585 = vadd.xlane.f32.xlu0 %v1584
    %v1586 = vpop.xlane.xlu0 %1585
    %v1587 = vsel %vm299, %v1583, 0.0
    %1588 = vadd.xlane.f32.xlu0 %v1587
    %v1589 = vpop.xlane.xlu0 %1588
    %v1590 = vmul.f32 %v1586, 0.010416667
    %v1591 = vmul.f32 %v1589, 0.010416667
    %v1592 = vadd.f32 %v1590, 1e-06
    %v1593 = vadd.f32 %v1591, 1e-06
    %v1594 = vrsqrt.pop %v1592
    %v1595 = vrsqrt.pop %v1593
    %v1596 = vmul.f32 %v1580, %v1594
    %v1597 = vmul.f32 %v1581, %v1595
    %v1598 = vlaneseq
    %v1599 = vshrl.u32 %v1598, 7
    %v1600 = vsub.s32 1, %v1599
    %v1601 = vrot.slane %v296, %v1600
    %v1602 = vmul.f32 %v1596, %v1601
    %v1603 = vmul.f32 %v1597, %v1601
    %s1604 = smul.u32 8, 12
    %s1605 = smul.u32 %s1604, 4
    %s1606 = sshll.u32 %s1605, 4
    %1607 = dma.done [#allocation4], %s1606
    %s1608 = smul.u32 256, 1
    %s1609 = sshll.u32 %s1608, 4
    %1610 = dma.done %s188, %s1609
    %v1611 = vld [vmem:[#allocation2] sm:$0xff]
    %v1612 = vld [vmem:[#allocation2 + $0x8] sm:$0xff]
    %v1613 = vld [vmem:[#allocation2 + $0x10] sm:$0xff]
    %v1614 = vld [vmem:[#allocation2 + $0x18] sm:$0xff]
    %v1615 = vld [vmem:[#allocation2 + $0x20] sm:$0xff]
    %v1616 = vld [vmem:[#allocation2 + $0x28] sm:$0xff]
    %v1617 = vld [vmem:[#allocation2 + $0x30] sm:$0xff]
    %v1618 = vld [vmem:[#allocation2 + $0x38] sm:$0xff]
    %v1619 = vld [vmem:[#allocation2 + $0x40] sm:$0xff]
    %v1620 = vld [vmem:[#allocation2 + $0x48] sm:$0xff]
    %v1621 = vld [vmem:[#allocation2 + $0x50] sm:$0xff]
    %v1622 = vld [vmem:[#allocation2 + $0x58] sm:$0xff]
    %v1623 = vld [vmem:[#allocation2 + $0x60] sm:$0xff]
    %v1624 = vld [vmem:[#allocation2 + $0x68] sm:$0xff]
    %v1625 = vld [vmem:[#allocation2 + $0x70] sm:$0xff]
    %v1626 = vld [vmem:[#allocation2 + $0x78] sm:$0xff]
    %v1627 = vld [vmem:[#allocation2 + $0x80] sm:$0xff]
    %v1628 = vld [vmem:[#allocation2 + $0x88] sm:$0xff]
    %v1629 = vld [vmem:[#allocation2 + $0x90] sm:$0xff]
    %v1630 = vld [vmem:[#allocation2 + $0x98] sm:$0xff]
    %v1631 = vld [vmem:[#allocation2 + $0xa0] sm:$0xff]
    %v1632 = vld [vmem:[#allocation2 + $0xa8] sm:$0xff]
    %v1633 = vld [vmem:[#allocation2 + $0xb0] sm:$0xff]
    %v1634 = vld [vmem:[#allocation2 + $0xb8] sm:$0xff]
    %v1635 = vld [vmem:[#allocation2 + $0xc0] sm:$0xff]
    %v1636 = vld [vmem:[#allocation2 + $0xc8] sm:$0xff]
    %v1637 = vld [vmem:[#allocation2 + $0xd0] sm:$0xff]
    %v1638 = vld [vmem:[#allocation2 + $0xd8] sm:$0xff]
    %v1639 = vld [vmem:[#allocation2 + $0xe0] sm:$0xff]
    %v1640 = vld [vmem:[#allocation2 + $0xe8] sm:$0xff]
    %v1641 = vld [vmem:[#allocation2 + $0xf0] sm:$0xff]
    %v1642 = vld [vmem:[#allocation2 + $0xf8] sm:$0xff]
    %v1643 = vld [vmem:[#allocation2 + $0x100] sm:$0xff]
    %v1644 = vld [vmem:[#allocation2 + $0x108] sm:$0xff]
    %v1645 = vld [vmem:[#allocation2 + $0x110] sm:$0xff]
    %v1646 = vld [vmem:[#allocation2 + $0x118] sm:$0xff]
    %v1647 = vld [vmem:[#allocation2 + $0x120] sm:$0xff]
    %v1648 = vld [vmem:[#allocation2 + $0x128] sm:$0xff]
    %v1649 = vld [vmem:[#allocation2 + $0x130] sm:$0xff]
    %v1650 = vld [vmem:[#allocation2 + $0x138] sm:$0xff]
    %v1651 = vld [vmem:[#allocation2 + $0x140] sm:$0xff]
    %v1652 = vld [vmem:[#allocation2 + $0x148] sm:$0xff]
    %v1653 = vld [vmem:[#allocation2 + $0x150] sm:$0xff]
    %v1654 = vld [vmem:[#allocation2 + $0x158] sm:$0xff]
    %v1655 = vld [vmem:[#allocation2 + $0x160] sm:$0xff]
    %v1656 = vld [vmem:[#allocation2 + $0x168] sm:$0xff]
    %v1657 = vld [vmem:[#allocation2 + $0x170] sm:$0xff]
    %v1658 = vld [vmem:[#allocation2 + $0x178] sm:$0xff]
    %v1660 = vsel %vm299, %v1602, 0
    %v1663 = vsel %vm299, %v1603, 0
    %1665 = vmatprep.subr.mxu0 0.0
    %1666 = vmatpush1.msra.mxu0 0.0
    %1667 = vmatprep.subr.mxu0 0.0
    %1668 = vmatpush1.msra.mxu0 0.0
    %1669 = vmatprep.subr.mxu0 0.0
    %1670 = vmatpush1.msra.mxu0 0.0
    %1671 = vmatprep.subr.mxu0 0.0
    %1672 = vmatpush1.msra.mxu0 0.0
    %1673 = vmatprep.subr.mxu0 %v1656
    %1674 = vmatpush1.msra.mxu0 %v1655
    %1675 = vmatprep.subr.mxu0 %v1652
    %1676 = vmatpush1.msra.mxu0 %v1651
    %1677 = vmatprep.subr.mxu0 %v1648
    %1678 = vmatpush1.msra.mxu0 %v1647
    %1679 = vmatprep.subr.mxu0 %v1644
    %1680 = vmatpush1.msra.mxu0 %v1643
    %1681 = vmatprep.subr.mxu0 %v1640
    %1682 = vmatpush1.msra.mxu0 %v1639
    %1683 = vmatprep.subr.mxu0 %v1636
    %1684 = vmatpush1.msra.mxu0 %v1635
    %1685 = vmatprep.subr.mxu0 %v1632
    %1686 = vmatpush1.msra.mxu0 %v1631
    %1687 = vmatprep.subr.mxu0 %v1628
    %1688 = vmatpush1.msra.mxu0 %v1627
    %1689 = vmatprep.subr.mxu0 %v1624
    %1690 = vmatpush1.msra.mxu0 %v1623
    %1691 = vmatprep.subr.mxu0 %v1620
    %1692 = vmatpush1.msra.mxu0 %v1619
    %1693 = vmatprep.subr.mxu0 %v1616
    %1694 = vmatpush1.msra.mxu0 %v1615
    %1695 = vmatprep.subr.mxu0 %v1612
    %1696 = vmatpush1.msra.mxu0 %v1611
    %1697 = vmatprep.subr.mxu0 0.0
    %1698 = vmatpush2.msra.mxu0 0.0
    %1699 = vmatprep.subr.mxu0 0.0
    %1700 = vmatpush2.msra.mxu0 0.0
    %1701 = vmatprep.subr.mxu0 0.0
    %1702 = vmatpush2.msra.mxu0 0.0
    %1703 = vmatprep.subr.mxu0 0.0
    %1704 = vmatpush2.msra.mxu0 0.0
    %1705 = vmatprep.subr.mxu0 0.0
    %1706 = vmatpush2.msra.mxu0 0.0
    %1707 = vmatprep.subr.mxu0 0.0
    %1708 = vmatpush2.msra.mxu0 0.0
    %1709 = vmatprep.subr.mxu0 0.0
    %1710 = vmatpush2.msra.mxu0 0.0
    %1711 = vmatprep.subr.mxu0 0.0
    %1712 = vmatpush2.msra.mxu0 0.0
    %1713 = vmatprep.subr.mxu0 0.0
    %1714 = vmatpush2.msra.mxu0 0.0
    %1715 = vmatprep.subr.mxu0 0.0
    %1716 = vmatpush2.msra.mxu0 0.0
    %1717 = vmatprep.subr.mxu0 0.0
    %1718 = vmatpush2.msra.mxu0 0.0
    %1719 = vmatprep.subr.mxu0 0.0
    %1720 = vmatpush2.msra.mxu0 0.0
    %1721 = vmatprep.subr.mxu0 0.0
    %1722 = vmatpush2.msra.mxu0 0.0
    %1723 = vmatprep.subr.mxu0 0.0
    %1724 = vmatpush2.msra.mxu0 0.0
    %1725 = vmatprep.subr.mxu0 0.0
    %1726 = vmatpush2.msra.mxu0 0.0
    %1727 = vmatprep.subr.mxu0 0.0
    %1728 = vmatpush2.msra.mxu0 0.0
    %1729 = vmatprep.mubr.f32.mxu0 0.0
    %1730 = vmatmul.mubr.f32.gmra.mxu0 %v1660
    %v1731 = vpop.f32.mrf.mxu0
    %v1732 = vadd.f32 0.0, %v1731
    %v1733 = vpop.f32.mrf.mxu0
    %v1734 = vadd.f32 0.0, %v1733
    %1735 = vmatprep.mubr.f32.mxu0 0.0
    %1736 = vmatmul.mubr.f32.gmra.mxu0 %v1663
    %v1737 = vpop.f32.mrf.mxu0
    %v1738 = vadd.f32 0.0, %v1737
    %v1739 = vpop.f32.mrf.mxu0
    %v1740 = vadd.f32 0.0, %v1739
    %1741 = vdwg.mxu0
    %1742 = vmatprep.subr.mxu0 0.0
    %1743 = vmatpush1.msra.mxu0 0.0
    %1744 = vmatprep.subr.mxu0 0.0
    %1745 = vmatpush1.msra.mxu0 0.0
    %1746 = vmatprep.subr.mxu0 0.0
    %1747 = vmatpush1.msra.mxu0 0.0
    %1748 = vmatprep.subr.mxu0 0.0
    %1749 = vmatpush1.msra.mxu0 0.0
    %1750 = vmatprep.subr.mxu0 %v1658
    %1751 = vmatpush1.msra.mxu0 %v1657
    %1752 = vmatprep.subr.mxu0 %v1654
    %1753 = vmatpush1.msra.mxu0 %v1653
    %1754 = vmatprep.subr.mxu0 %v1650
    %1755 = vmatpush1.msra.mxu0 %v1649
    %1756 = vmatprep.subr.mxu0 %v1646
    %1757 = vmatpush1.msra.mxu0 %v1645
    %1758 = vmatprep.subr.mxu0 %v1642
    %1759 = vmatpush1.msra.mxu0 %v1641
    %1760 = vmatprep.subr.mxu0 %v1638
    %1761 = vmatpush1.msra.mxu0 %v1637
    %1762 = vmatprep.subr.mxu0 %v1634
    %1763 = vmatpush1.msra.mxu0 %v1633
    %1764 = vmatprep.subr.mxu0 %v1630
    %1765 = vmatpush1.msra.mxu0 %v1629
    %1766 = vmatprep.subr.mxu0 %v1626
    %1767 = vmatpush1.msra.mxu0 %v1625
    %1768 = vmatprep.subr.mxu0 %v1622
    %1769 = vmatpush1.msra.mxu0 %v1621
    %1770 = vmatprep.subr.mxu0 %v1618
    %1771 = vmatpush1.msra.mxu0 %v1617
    %1772 = vmatprep.subr.mxu0 %v1614
    %1773 = vmatpush1.msra.mxu0 %v1613
    %1774 = vmatprep.subr.mxu0 0.0
    %1775 = vmatpush2.msra.mxu0 0.0
    %1776 = vmatprep.subr.mxu0 0.0
    %1777 = vmatpush2.msra.mxu0 0.0
    %1778 = vmatprep.subr.mxu0 0.0
    %1779 = vmatpush2.msra.mxu0 0.0
    %1780 = vmatprep.subr.mxu0 0.0
    %1781 = vmatpush2.msra.mxu0 0.0
    %1782 = vmatprep.subr.mxu0 0.0
    %1783 = vmatpush2.msra.mxu0 0.0
    %1784 = vmatprep.subr.mxu0 0.0
    %1785 = vmatpush2.msra.mxu0 0.0
    %1786 = vmatprep.subr.mxu0 0.0
    %1787 = vmatpush2.msra.mxu0 0.0
    %1788 = vmatprep.subr.mxu0 0.0
    %1789 = vmatpush2.msra.mxu0 0.0
    %1790 = vmatprep.subr.mxu0 0.0
    %1791 = vmatpush2.msra.mxu0 0.0
    %1792 = vmatprep.subr.mxu0 0.0
    %1793 = vmatpush2.msra.mxu0 0.0
    %1794 = vmatprep.subr.mxu0 0.0
    %1795 = vmatpush2.msra.mxu0 0.0
    %1796 = vmatprep.subr.mxu0 0.0
    %1797 = vmatpush2.msra.mxu0 0.0
    %1798 = vmatprep.subr.mxu0 0.0
    %1799 = vmatpush2.msra.mxu0 0.0
    %1800 = vmatprep.subr.mxu0 0.0
    %1801 = vmatpush2.msra.mxu0 0.0
    %1802 = vmatprep.subr.mxu0 0.0
    %1803 = vmatpush2.msra.mxu0 0.0
    %1804 = vmatprep.subr.mxu0 0.0
    %1805 = vmatpush2.msra.mxu0 0.0
    %1806 = vmatprep.mubr.f32.mxu0 0.0
    %1807 = vmatmul.mubr.f32.gmra.mxu0 %v1660
    %v1808 = vpop.f32.mrf.mxu0
    %v1809 = vadd.f32 0.0, %v1808
    %v1810 = vpop.f32.mrf.mxu0
    %v1811 = vadd.f32 0.0, %v1810
    %1812 = vmatprep.mubr.f32.mxu0 0.0
    %1813 = vmatmul.mubr.f32.gmra.mxu0 %v1663
    %v1814 = vpop.f32.mrf.mxu0
    %v1815 = vadd.f32 0.0, %v1814
    %v1816 = vpop.f32.mrf.mxu0
    %v1817 = vadd.f32 0.0, %v1816
    %1818 = vdwg.mxu0
    %v1819 = vxor.u32 %v1732, 2147483648
    %v1820 = vxor.u32 %v1734, 2147483648
    %v1821 = vxor.u32 %v1738, 2147483648
    %v1822 = vxor.u32 %v1740, 2147483648
    %v1823 = vmul.f32 %v1819, 1.442695
    %v1824 = vpow.pop %v1823
    %v1825 = vmul.f32 %v1820, 1.442695
    %v1826 = vpow.pop %v1825
    %v1827 = vmul.f32 %v1821, 1.442695
    %v1828 = vpow.pop %v1827
    %v1829 = vmul.f32 %v1822, 1.442695
    %v1830 = vpow.pop %v1829
    %v1831 = vadd.f32 %v1824, 1.0
    %v1832 = vadd.f32 %v1826, 1.0
    %v1833 = vadd.f32 %v1828, 1.0
    %v1834 = vadd.f32 %v1830, 1.0
    %v1835 = vrcp.pop %v1831
    %v1836 = vmul.f32 1.0, %v1835
    %v1837 = vrcp.pop %v1832
    %v1838 = vmul.f32 1.0, %v1837
    %v1839 = vrcp.pop %v1833
    %v1840 = vmul.f32 1.0, %v1839
    %v1841 = vrcp.pop %v1834
    %v1842 = vmul.f32 1.0, %v1841
    %v1843 = vmul.f32 %v1732, %v1836
    %v1844 = vmul.f32 %v1734, %v1838
    %v1845 = vmul.f32 %v1738, %v1840
    %v1846 = vmul.f32 %v1740, %v1842
    %v1847 = vmul.f32 %v1843, %v1809
    %v1848 = vmul.f32 %v1844, %v1811
    %v1849 = vmul.f32 %v1845, %v1815
    %v1850 = vmul.f32 %v1846, %v1817
    %v1851 = vld [vmem:[#allocation3] sm:$0xff]
    %v1852 = vld [vmem:[#allocation3 + $0x8] sm:$0xff]
    %v1853 = vld [vmem:[#allocation3 + $0x10] sm:$0xff]
    %v1854 = vld [vmem:[#allocation3 + $0x18] sm:$0xff]
    %v1855 = vld [vmem:[#allocation3 + $0x20] sm:$0xff]
    %v1856 = vld [vmem:[#allocation3 + $0x28] sm:$0xff]
    %v1857 = vld [vmem:[#allocation3 + $0x30] sm:$0xff]
    %v1858 = vld [vmem:[#allocation3 + $0x38] sm:$0xff]
    %v1859 = vld [vmem:[#allocation3 + $0x40] sm:$0xff]
    %v1860 = vld [vmem:[#allocation3 + $0x48] sm:$0xff]
    %v1861 = vld [vmem:[#allocation3 + $0x50] sm:$0xff]
    %v1862 = vld [vmem:[#allocation3 + $0x58] sm:$0xff]
    %v1863 = vld [vmem:[#allocation3 + $0x60] sm:$0xff]
    %v1864 = vld [vmem:[#allocation3 + $0x68] sm:$0xff]
    %v1865 = vld [vmem:[#allocation3 + $0x70] sm:$0xff]
    %v1866 = vld [vmem:[#allocation3 + $0x78] sm:$0xff]
    %v1867 = vld [vmem:[#allocation3 + $0x80] sm:$0xff]
    %v1868 = vld [vmem:[#allocation3 + $0x88] sm:$0xff]
    %v1869 = vld [vmem:[#allocation3 + $0x90] sm:$0xff]
    %v1870 = vld [vmem:[#allocation3 + $0x98] sm:$0xff]
    %v1871 = vld [vmem:[#allocation3 + $0xa0] sm:$0xff]
    %v1872 = vld [vmem:[#allocation3 + $0xa8] sm:$0xff]
    %v1873 = vld [vmem:[#allocation3 + $0xb0] sm:$0xff]
    %v1874 = vld [vmem:[#allocation3 + $0xb8] sm:$0xff]
    %v1875 = vld [vmem:[#allocation3 + $0xc0] sm:$0xff]
    %v1876 = vld [vmem:[#allocation3 + $0xc8] sm:$0xff]
    %v1877 = vld [vmem:[#allocation3 + $0xd0] sm:$0xff]
    %v1878 = vld [vmem:[#allocation3 + $0xd8] sm:$0xff]
    %v1879 = vld [vmem:[#allocation3 + $0xe0] sm:$0xff]
    %v1880 = vld [vmem:[#allocation3 + $0xe8] sm:$0xff]
    %v1881 = vld [vmem:[#allocation3 + $0xf0] sm:$0xff]
    %v1882 = vld [vmem:[#allocation3 + $0xf8] sm:$0xff]
    %1883 = vmatprep.subr.mxu0 0.0
    %1884 = vmatpush1.msra.mxu0 %v1866
    %1885 = vmatprep.subr.mxu0 0.0
    %1886 = vmatpush1.msra.mxu0 %v1865
    %1887 = vmatprep.subr.mxu0 0.0
    %1888 = vmatpush1.msra.mxu0 %v1864
    %1889 = vmatprep.subr.mxu0 0.0
    %1890 = vmatpush1.msra.mxu0 %v1863
    %1891 = vmatprep.subr.mxu0 0.0
    %1892 = vmatpush1.msra.mxu0 %v1862
    %1893 = vmatprep.subr.mxu0 0.0
    %1894 = vmatpush1.msra.mxu0 %v1861
    %1895 = vmatprep.subr.mxu0 0.0
    %1896 = vmatpush1.msra.mxu0 %v1860
    %1897 = vmatprep.subr.mxu0 0.0
    %1898 = vmatpush1.msra.mxu0 %v1859
    %1899 = vmatprep.subr.mxu0 0.0
    %1900 = vmatpush1.msra.mxu0 %v1858
    %1901 = vmatprep.subr.mxu0 0.0
    %1902 = vmatpush1.msra.mxu0 %v1857
    %1903 = vmatprep.subr.mxu0 0.0
    %1904 = vmatpush1.msra.mxu0 %v1856
    %1905 = vmatprep.subr.mxu0 0.0
    %1906 = vmatpush1.msra.mxu0 %v1855
    %1907 = vmatprep.subr.mxu0 0.0
    %1908 = vmatpush1.msra.mxu0 %v1854
    %1909 = vmatprep.subr.mxu0 0.0
    %1910 = vmatpush1.msra.mxu0 %v1853
    %1911 = vmatprep.subr.mxu0 0.0
    %1912 = vmatpush1.msra.mxu0 %v1852
    %1913 = vmatprep.subr.mxu0 0.0
    %1914 = vmatpush1.msra.mxu0 %v1851
    %1915 = vmatprep.subr.mxu0 0.0
    %1916 = vmatpush2.msra.mxu0 %v1882
    %1917 = vmatprep.subr.mxu0 0.0
    %1918 = vmatpush2.msra.mxu0 %v1881
    %1919 = vmatprep.subr.mxu0 0.0
    %1920 = vmatpush2.msra.mxu0 %v1880
    %1921 = vmatprep.subr.mxu0 0.0
    %1922 = vmatpush2.msra.mxu0 %v1879
    %1923 = vmatprep.subr.mxu0 0.0
    %1924 = vmatpush2.msra.mxu0 %v1878
    %1925 = vmatprep.subr.mxu0 0.0
    %1926 = vmatpush2.msra.mxu0 %v1877
    %1927 = vmatprep.subr.mxu0 0.0
    %1928 = vmatpush2.msra.mxu0 %v1876
    %1929 = vmatprep.subr.mxu0 0.0
    %1930 = vmatpush2.msra.mxu0 %v1875
    %1931 = vmatprep.subr.mxu0 0.0
    %1932 = vmatpush2.msra.mxu0 %v1874
    %1933 = vmatprep.subr.mxu0 0.0
    %1934 = vmatpush2.msra.mxu0 %v1873
    %1935 = vmatprep.subr.mxu0 0.0
    %1936 = vmatpush2.msra.mxu0 %v1872
    %1937 = vmatprep.subr.mxu0 0.0
    %1938 = vmatpush2.msra.mxu0 %v1871
    %1939 = vmatprep.subr.mxu0 0.0
    %1940 = vmatpush2.msra.mxu0 %v1870
    %1941 = vmatprep.subr.mxu0 0.0
    %1942 = vmatpush2.msra.mxu0 %v1869
    %1943 = vmatprep.subr.mxu0 0.0
    %1944 = vmatpush2.msra.mxu0 %v1868
    %1945 = vmatprep.subr.mxu0 0.0
    %1946 = vmatpush2.msra.mxu0 %v1867
    %1947 = vmatprep.mubr.f32.mxu0 %v1848
    %1948 = vmatmul.mubr.f32.gmra.mxu0 %v1847
    %v1949 = vpop.f32.mrf.mxu0
    %v1950 = vadd.f32 0.0, %v1949
    %v1951 = vpop.f32.mrf.mxu0
    %1952 = vmatprep.mubr.f32.mxu0 %v1850
    %1953 = vmatmul.mubr.f32.gmra.mxu0 %v1849
    %v1954 = vpop.f32.mrf.mxu0
    %v1955 = vadd.f32 0.0, %v1954
    %v1956 = vpop.f32.mrf.mxu0
    %1957 = vdwg.mxu0
    %v1958 = vadd.f32 %v1580, %v1950
    %v1959 = vadd.f32 %v1581, %v1955
    %1960 = vst.msk [vmem:[#allocation10] sm:$0xff] %vm299, %v1958
    %1961 = vst.msk [vmem:[#allocation10 + $0x8] sm:$0xff] %vm299, %v1959
    // Predicated region
    $region98: #{tpu_custom_call.1} parent=1 // pred_check
      _
    $region99: #{tpu_custom_call.1} parent=1 // pred_check_branch
      %1963 = sbr.rel (0) target = $region101
    $region100: #{tpu_custom_call.1} parent=1 // pred_region
      %s1965 = ssub.s32 256, 256
      %1966 = vsyncadd [#allocation7], %s1965
      %s1967 = sshll.u32 [#allocation10], 4
      %s1968 = int_to_ptr.vmem [resolvable:$true] %s1967
      %1973 = dma.vmem_to_hbm [thread:$0]  %s1968, 256, %s7, [#allocation7], 128, 128, 8
    $region101: #{tpu_custom_call.1} parent=1 // pred_fallthru
      _
    // Predicated region
    $region102: #{tpu_custom_call.1} parent=1 // pred_check
      _
    $region103: #{tpu_custom_call.1} parent=1 // pred_check_branch
      %1975 = sbr.rel (0) target = $region105
    $region104: #{tpu_custom_call.1} parent=1 // pred_region
      %1976 = dma.done [#allocation7], 256
    $region105: #{tpu_custom_call.1} parent=1 // pred_fallthru
      _
    %1977 = vsyncpa [#allocation6], 1
    %1978 = vsyncpa [#allocation9], 1
    %1979 = vsyncpa [#allocation7], 1
  %1980 = vsyncmov [#allocation4]
  %s1981 = vpop.sfrf %1980
  %p1982 = scmp.eq.s32.totalorder %s1981, 0
  %p1983 = pneg %p1982
  %1985 = shalt.err (%p1983)
  %s1986 = scalar_lea.sflag [#allocation4], 1
  %1987 = vsyncmov %s1986
  %s1988 = vpop.sfrf %1987
  %p1989 = scmp.eq.s32.totalorder %s1988, 0
  %p1990 = pneg %p1989
  %1992 = shalt.err (%p1990)

</llo_original>
